<compile_context>
chip_gen: v7x
topology: tpu7x:2x2x1
jax: 0.10.0
libtpu: 0.0.40
codegen_flags: <defaults>
</compile_context>

<pallas_src>
import jax
import jax.numpy as jnp
from jax.experimental import pallas as pl
from jax.experimental.pallas import tpu as pltpu

HID1, HID2 = 512, 256


def _head_kernel(p_ref, w1_ref, b1_ref, w2_ref, b2_ref, w3_ref, b3_ref,
                 out_ref, acc_ref):
    k = pl.program_id(0)

    @pl.when(k == 0)
    def _():
        # Fold the linear1 bias into the accumulator init (frees the epilogue).
        acc_ref[...] = jnp.broadcast_to(b1_ref[...], acc_ref.shape)

    # Partial linear1: bf16 x bf16 on the MXU, f32 accumulation in VMEM scratch.
    acc_ref[...] += jnp.dot(p_ref[...].astype(jnp.bfloat16), w1_ref[...],
                            preferred_element_type=jnp.float32)

    @pl.when(k == pl.num_programs(0) - 1)
    def _():
        # Dropout is identity in eval mode.
        h1 = jnp.maximum(acc_ref[...], 0.0)                       # (B, 512) f32
        h2 = jnp.dot(h1.astype(jnp.bfloat16), w2_ref[...],
                     preferred_element_type=jnp.float32)
        h2 = jnp.maximum(h2 + b2_ref[...], 0.0)                   # (B, 256) f32
        # Final 256 -> 1 on the VPU (avoid an N=1 MXU matmul on the tail);
        # w3 is only 256 elements so the widening cast is negligible.
        out = jnp.sum(h2 * w3_ref[...].astype(jnp.float32),
                      axis=-1, keepdims=True)
        out_ref[...] = out + b3_ref[...]                          # (B, 1)


def _pick_tk(C, tk):
    """Largest 128-multiple divisor of C that is <= requested tk."""
    if C % tk == 0:
        return tk
    cand = (min(tk, C) // 128) * 128
    while cand >= 128:
        if C % cand == 0:
            return cand
        cand -= 128
    return C  # last resort: single block


def model_forward_head(x_feat, params, *, tk=768):
    """x_feat: (B, C, H, W) float32 backbone features. Returns (B, 1) float32.

    tk: channel-block size for streaming w1.  Default 768 (2 grid steps over
    C=1536); sweep {512, 768, 1536} per generation (smaller on v5e where DMA
    overlap matters more, bigger on v7x which is grid-overhead-bound).
    """
    w1, b1, w2, b2, w3, b3 = params
    B, C, H, W = x_feat.shape
    tk = _pick_tk(C, tk)
    n_chunks = C // tk

    # GAP in the wrapper: XLA reduces NCHW natively (no relayout pass), and
    # `pooled` is only B*C*4 bytes, so the kernel's input traffic is now
    # dominated solely by the bf16 w1 stream.
    pooled = jnp.mean(x_feat, axis=(2, 3))                        # (B, C) f32

    # TODO(synk): for large serving batches on v7x (2 TCs), add a leading
    # "parallel" grid axis over B; unnecessary at B=2.

    flops = 2.0 * B * (C * HID1 + HID1 * HID2 + HID2)
    bytes_accessed = (pooled.size * pooled.dtype.itemsize
                      + sum(p.size * p.dtype.itemsize for p in params)
                      + B * 4)

    kernel = pl.pallas_call(
        _head_kernel,
        out_shape=jax.ShapeDtypeStruct((B, 1), jnp.float32),
        grid=(n_chunks,),
        in_specs=[
            pl.BlockSpec((B, tk), lambda k: (0, k)),          # pooled chunk (f32)
            pl.BlockSpec((tk, HID1), lambda k: (k, 0)),       # w1 chunk (bf16)
            pl.BlockSpec((1, HID1), lambda k: (0, 0)),        # b1 (f32)
            pl.BlockSpec((HID1, HID2), lambda k: (0, 0)),     # w2 (bf16)
            pl.BlockSpec((1, HID2), lambda k: (0, 0)),        # b2 (f32)
            pl.BlockSpec((1, HID2), lambda k: (0, 0)),        # w3 row (bf16)
            pl.BlockSpec((1, 1), lambda k: (0, 0)),           # b3 (f32)
        ],
        out_specs=pl.BlockSpec((B, 1), lambda k: (0, 0)),
        scratch_shapes=[pltpu.VMEM((B, HID1), jnp.float32)],  # linear1 accumulator
        compiler_params=pltpu.CompilerParams(
            dimension_semantics=("arbitrary",),               # reduction axis
        ),
        cost_estimate=pl.CostEstimate(
            flops=int(flops),
            transcendentals=0,
            bytes_accessed=int(bytes_accessed),
        ),
    )
    return kernel(pooled, w1, b1, w2, b2, w3, b3)


def init_params(key, feat_dim):
    """nn.Linear-style init (U[-1/sqrt(fan_in), +]); weights stored in bf16."""
    def linear(key, fan_in, fan_out):
        kw, kb = jax.random.split(key)
        bound = 1.0 / jnp.sqrt(float(fan_in))
        # Stored transposed: (fan_in, fan_out) so the kernel does x @ W.
        w = jax.random.uniform(kw, (fan_in, fan_out), jnp.float32, -bound, bound)
        b = jax.random.uniform(kb, (1, fan_out), jnp.float32, -bound, bound)
        return w.astype(jnp.bfloat16), b

    k1, k2, k3 = jax.random.split(key, 3)
    w1, b1 = linear(k1, feat_dim, HID1)
    w2, b2 = linear(k2, HID1, HID2)
    w3_col, b3 = linear(k3, HID2, 1)
    w3 = w3_col.reshape(1, HID2)     # row form for the VPU reduce in the kernel
    return (w1, b1, w2, b2, w3, b3)


def reference_head(x_feat, params):
    """Plain-JAX reference with the same bf16 operand quantization."""
    w1, b1, w2, b2, w3, b3 = params
    pooled = jnp.mean(x_feat, axis=(2, 3))
    h1 = jnp.dot(pooled.astype(jnp.bfloat16), w1,
                 preferred_element_type=jnp.float32) + b1
    h1 = jnp.maximum(h1, 0.0)
    h2 = jnp.dot(h1.astype(jnp.bfloat16), w2,
                 preferred_element_type=jnp.float32) + b2
    h2 = jnp.maximum(h2, 0.0)
    return jnp.sum(h2 * w3.astype(jnp.float32), axis=-1, keepdims=True) + b3


if __name__ == "__main__":
    # batch=2, C=1536 (EfficientNet-B3 forward_features channels), spatial 8x8.
    B, C, H, W = 2, 1536, 8, 8

    key = jax.random.PRNGKey(0)
    kx, kp = jax.random.split(key)
    x_feat = jax.random.normal(kx, (B, C, H, W), jnp.float32)
    params = init_params(kp, C)

    out = jax.block_until_ready(model_forward_head(x_feat, params))
    ref = reference_head(x_feat, params)

    assert out.shape == (B, 1), out.shape
    assert jnp.allclose(out, ref, atol=5e-3, rtol=5e-3), (out, ref)

    print("KERNEL_OK")
</pallas_src>

<mosaic_0001>
module attributes {stable_mosaic.version = 11 : i64} {
  func.func @_head_kernel(%arg0: i32, %arg1: memref<2x768xf32, #tpu.memory_space<vmem>>, %arg2: memref<768x512xbf16, #tpu.memory_space<vmem>>, %arg3: memref<1x512xf32, #tpu.memory_space<vmem>>, %arg4: memref<512x256xbf16, #tpu.memory_space<vmem>>, %arg5: memref<1x256xf32, #tpu.memory_space<vmem>>, %arg6: memref<1x256xbf16, #tpu.memory_space<vmem>>, %arg7: memref<1x1xf32, #tpu.memory_space<vmem>>, %arg8: memref<2x1xf32, #tpu.memory_space<vmem>>, %arg9: memref<2x512xf32, #tpu.memory_space<vmem>>) attributes {dimension_semantics = [#tpu.dimension_semantics<arbitrary>], iteration_bounds = array<i64: 2>, scalar_prefetch = 0 : i64, scratch_operands = 1 : i64, tpu.core_type = #tpu.core_type<tc>, window_params = [{transform_indices = @transform_0, window_bounds = array<i64: 2, 768>}, {transform_indices = @transform_1, window_bounds = array<i64: 768, 512>}, {pipeline_mode = #tpu.pipeline_mode<synchronous>, transform_indices = @transform_2, window_bounds = array<i64: 1, 512>}, {pipeline_mode = #tpu.pipeline_mode<synchronous>, transform_indices = @transform_3, window_bounds = array<i64: 512, 256>}, {pipeline_mode = #tpu.pipeline_mode<synchronous>, transform_indices = @transform_4, window_bounds = array<i64: 1, 256>}, {pipeline_mode = #tpu.pipeline_mode<synchronous>, transform_indices = @transform_5, window_bounds = array<i64: 1, 256>}, {pipeline_mode = #tpu.pipeline_mode<synchronous>, transform_indices = @transform_6, window_bounds = array<i64: 1, 1>}, {pipeline_mode = #tpu.pipeline_mode<synchronous>, transform_indices = @transform_7, window_bounds = array<i64: 2, 1>}]} {
    %c0_i32 = arith.constant 0 : i32
    %0 = arith.cmpi eq, %arg0, %c0_i32 : i32
    %1 = arith.extui %0 : i1 to i32
    %c0_i32_0 = arith.constant 0 : i32
    %2 = arith.cmpi ne, %1, %c0_i32_0 : i32
    scf.if %2 {
      %c0_9 = arith.constant 0 : index
      %c0_10 = arith.constant 0 : index
      %13 = vector.load %arg3[%c0_9, %c0_10] : memref<1x512xf32, #tpu.memory_space<vmem>>, vector<1x512xf32>
      %14 = vector.shape_cast %13 : vector<1x512xf32> to vector<1x512xf32>
      %15 = vector.broadcast %14 : vector<1x512xf32> to vector<2x512xf32>
      %c0_11 = arith.constant 0 : index
      %c0_12 = arith.constant 0 : index
      %16 = vector.load %arg9[%c0_11, %c0_12] : memref<2x512xf32, #tpu.memory_space<vmem>>, vector<2x512xf32>
      tpu.vector_store %arg9[%c0_11, %c0_12], %15 {strides = array<i32>} : memref<2x512xf32, #tpu.memory_space<vmem>>, vector<2x512xf32>,
    } else {
    }
    %c0 = arith.constant 0 : index
    %c0_1 = arith.constant 0 : index
    %3 = vector.load %arg9[%c0, %c0_1] : memref<2x512xf32, #tpu.memory_space<vmem>>, vector<2x512xf32>
    %c0_2 = arith.constant 0 : index
    %c0_3 = arith.constant 0 : index
    %4 = vector.load %arg1[%c0_2, %c0_3] : memref<2x768xf32, #tpu.memory_space<vmem>>, vector<2x768xf32>
    %5 = arith.truncf %4 : vector<2x768xf32> to vector<2x768xbf16>
    %c0_4 = arith.constant 0 : index
    %c0_5 = arith.constant 0 : index
    %6 = vector.load %arg2[%c0_4, %c0_5] : memref<768x512xbf16, #tpu.memory_space<vmem>>, vector<768x512xbf16>
    %cst = arith.constant dense<0.000000e+00> : vector<2x512xf32>
    %7 = tpu.matmul %5, %6, %cst {dimension_numbers = #tpu.dot_dimension_numbers<[1], [0], [0], [1], [0, 0, 1, 1], [], []>} : vector<2x768xbf16>, vector<768x512xbf16>, vector<2x512xf32> -> vector<2x512xf32>
    %8 = arith.addf %3, %7 : vector<2x512xf32>
    %c0_6 = arith.constant 0 : index
    %c0_7 = arith.constant 0 : index
    %9 = vector.load %arg9[%c0_6, %c0_7] : memref<2x512xf32, #tpu.memory_space<vmem>>, vector<2x512xf32>
    tpu.vector_store %arg9[%c0_6, %c0_7], %8 {strides = array<i32>} : memref<2x512xf32, #tpu.memory_space<vmem>>, vector<2x512xf32>,
    %c1_i32 = arith.constant 1 : i32
    %10 = arith.cmpi eq, %arg0, %c1_i32 : i32
    %11 = arith.extui %10 : i1 to i32
    %c0_i32_8 = arith.constant 0 : i32
    %12 = arith.cmpi ne, %11, %c0_i32_8 : i32
    scf.if %12 {
      %c0_9 = arith.constant 0 : index
      %c0_10 = arith.constant 0 : index
      %13 = vector.load %arg9[%c0_9, %c0_10] : memref<2x512xf32, #tpu.memory_space<vmem>>, vector<2x512xf32>
      %cst_11 = arith.constant 0.000000e+00 : f32
      %14 = vector.broadcast %cst_11 : f32 to vector<2x512xf32>
      %15 = arith.maximumf %13, %14 : vector<2x512xf32>
      %16 = arith.truncf %15 : vector<2x512xf32> to vector<2x512xbf16>
      %c0_12 = arith.constant 0 : index
      %c0_13 = arith.constant 0 : index
      %17 = vector.load %arg4[%c0_12, %c0_13] : memref<512x256xbf16, #tpu.memory_space<vmem>>, vector<512x256xbf16>
      %cst_14 = arith.constant dense<0.000000e+00> : vector<2x256xf32>
      %18 = tpu.matmul %16, %17, %cst_14 {dimension_numbers = #tpu.dot_dimension_numbers<[1], [0], [0], [1], [0, 0, 1, 1], [], []>} : vector<2x512xbf16>, vector<512x256xbf16>, vector<2x256xf32> -> vector<2x256xf32>
      %c0_15 = arith.constant 0 : index
      %c0_16 = arith.constant 0 : index
      %19 = vector.load %arg5[%c0_15, %c0_16] : memref<1x256xf32, #tpu.memory_space<vmem>>, vector<1x256xf32>
      %20 = vector.broadcast %19 : vector<1x256xf32> to vector<2x256xf32>
      %21 = arith.addf %18, %20 : vector<2x256xf32>
      %cst_17 = arith.constant 0.000000e+00 : f32
      %22 = vector.broadcast %cst_17 : f32 to vector<2x256xf32>
      %23 = arith.maximumf %21, %22 : vector<2x256xf32>
      %c0_18 = arith.constant 0 : index
      %c0_19 = arith.constant 0 : index
      %24 = vector.load %arg6[%c0_18, %c0_19] : memref<1x256xbf16, #tpu.memory_space<vmem>>, vector<1x256xbf16>
      %25 = arith.extf %24 : vector<1x256xbf16> to vector<1x256xf32>
      %26 = vector.broadcast %25 : vector<1x256xf32> to vector<2x256xf32>
      %27 = arith.mulf %23, %26 : vector<2x256xf32>
      %cst_20 = arith.constant dense<0.000000e+00> : vector<2xf32>
      %28 = vector.multi_reduction <add>, %27, %cst_20 [1] : vector<2x256xf32> to vector<2xf32>
      %29 = vector.shape_cast %28 : vector<2xf32> to vector<2x1xf32>
      %c0_21 = arith.constant 0 : index
      %c0_22 = arith.constant 0 : index
      %30 = vector.load %arg7[%c0_21, %c0_22] : memref<1x1xf32, #tpu.memory_space<vmem>>, vector<1x1xf32>
      %31 = vector.broadcast %30 : vector<1x1xf32> to vector<2x1xf32>
      %32 = arith.addf %29, %31 : vector<2x1xf32>
      %c0_23 = arith.constant 0 : index
      %c0_24 = arith.constant 0 : index
      %33 = vector.load %arg8[%c0_23, %c0_24] : memref<2x1xf32, #tpu.memory_space<vmem>>, vector<2x1xf32>
      tpu.vector_store %arg8[%c0_23, %c0_24], %32 {strides = array<i32>} : memref<2x1xf32, #tpu.memory_space<vmem>>, vector<2x1xf32>,
    } else {
    }
    return
  }
  func.func @transform_0(%arg0: i32) -> (i32, i32) {
    %c0_i32 = arith.constant 0 : i32
    %c0_i32_0 = arith.constant 0 : i32
    return %c0_i32, %arg0 : i32, i32
  }
  func.func @transform_1(%arg0: i32) -> (i32, i32) {
    %c0_i32 = arith.constant 0 : i32
    %c0_i32_0 = arith.constant 0 : i32
    return %arg0, %c0_i32 : i32, i32
  }
  func.func @transform_2(%arg0: i32) -> (i32, i32) {
    %c0_i32 = arith.constant 0 : i32
    %c0_i32_0 = arith.constant 0 : i32
    %c0_i32_1 = arith.constant 0 : i32
    return %c0_i32, %c0_i32_0 : i32, i32
  }
  func.func @transform_3(%arg0: i32) -> (i32, i32) {
    %c0_i32 = arith.constant 0 : i32
    %c0_i32_0 = arith.constant 0 : i32
    %c0_i32_1 = arith.constant 0 : i32
    return %c0_i32, %c0_i32_0 : i32, i32
  }
  func.func @transform_4(%arg0: i32) -> (i32, i32) {
    %c0_i32 = arith.constant 0 : i32
    %c0_i32_0 = arith.constant 0 : i32
    %c0_i32_1 = arith.constant 0 : i32
    return %c0_i32, %c0_i32_0 : i32, i32
  }
  func.func @transform_5(%arg0: i32) -> (i32, i32) {
    %c0_i32 = arith.constant 0 : i32
    %c0_i32_0 = arith.constant 0 : i32
    %c0_i32_1 = arith.constant 0 : i32
    return %c0_i32, %c0_i32_0 : i32, i32
  }
  func.func @transform_6(%arg0: i32) -> (i32, i32) {
    %c0_i32 = arith.constant 0 : i32
    %c0_i32_0 = arith.constant 0 : i32
    %c0_i32_1 = arith.constant 0 : i32
    return %c0_i32, %c0_i32_0 : i32, i32
  }
  func.func @transform_7(%arg0: i32) -> (i32, i32) {
    %c0_i32 = arith.constant 0 : i32
    %c0_i32_0 = arith.constant 0 : i32
    %c0_i32_1 = arith.constant 0 : i32
    return %c0_i32, %c0_i32_0 : i32, i32
  }
}

</mosaic_0001>

<llo_original>
// kernel: tpu_custom_call.1
$region0: #{tpu_custom_call.1}
  #allocation0 [shape = 'u32[]', space=smem, size = 0x4, offset = 0x4, fixed_abs, tag = 'smem constant byte address 0x4 - core index']
  #allocation1 [shape = 'u32[144,128]{1,0:T(1,128)}', space=vmem, size = 0x12000, scoped, tag = 'internal scratch']
  #allocation2 [shape = 'f32[2,512]{1,0:T(2,128)}', space=vmem, size = 0x1000, scoped, tag = 'scratch operand']
  #allocation3 [shape = 'f32[1,1]{1,0:T(1,128)S(1)}', space=vmem, size = 0x200, scoped, tag = 'scoped memory for tpu_custom_call.1']
  %s0 = inlined_call_operand.hbm [shape: f32[2,1536], index: 0, kind: input, shape index: {}]
  %s1 = inlined_call_operand.hbm [shape: bf16[1536,512], index: 1, kind: input, shape index: {}]
  %s2 = inlined_call_operand.hbm [shape: f32[1,512], index: 2, kind: input, shape index: {}]
  %s3 = inlined_call_operand.hbm [shape: bf16[512,256], index: 3, kind: input, shape index: {}]
  %s4 = inlined_call_operand.hbm [shape: f32[1,256], index: 4, kind: input, shape index: {}]
  %s5 = inlined_call_operand.hbm [shape: bf16[1,256], index: 5, kind: input, shape index: {}]
  %s6 = inlined_call_operand.<no memory space> [shape: f32[1,1], index: 6, kind: input, shape index: {}]
  %s7 = inlined_call_operand.vmem [shape: f32[2,1], index: 7, kind: output, shape index: {}]
  %s8 = sld [smem:[#allocation0]]
  $region93: #{tpu_custom_call.1} parent=0
    _
  %s10 = ssub.s32 1, %s8
  %s11 = scalar_select 0, %s10, %s8
  %v12 = vstv %s6
  %13 = vst [vmem:[#allocation3] sm:$0x1] %v12
  $region1: #{tpu_custom_call.1} parent=0
    #allocation4 [shape = 'u8[12288]{0}', space=vmem, size = 0x3000, scoped, tag = 'input window, operand 0']
    #allocation5 [shape = 's32[2]{0}', space=sflag, size = 0x8, scoped, tag = 'scoped memory for tpu_custom_call.1']
    #allocation6 [shape = 'u8[1572864]{0}', space=vmem, size = 0x180000, scoped, tag = 'input window, operand 1']
    #allocation7 [shape = 's32[2]{0}', space=sflag, size = 0x8, scoped, tag = 'scoped memory for tpu_custom_call.1']
    #allocation8 [shape = 'u8[2048]{0}', space=vmem, size = 0x800, scoped, tag = 'input window, operand 2, single buffered']
    #allocation9 [shape = 'u8[262144]{0}', space=vmem, size = 0x40000, scoped, tag = 'input window, operand 3, single buffered']
    #allocation10 [shape = 's32[1]{0}', space=sflag, size = 0x4, scoped, tag = 'scoped memory for tpu_custom_call.1']
    #allocation11 [shape = 'u8[1024]{0}', space=vmem, size = 0x400, scoped, tag = 'input window, operand 4, single buffered']
    #allocation12 [shape = 'u8[1024]{0}', space=vmem, size = 0x400, scoped, tag = 'input window, operand 5, single buffered']
    #allocation13 [shape = 's32[1]{0}', space=sflag, size = 0x4, scoped, tag = 'scoped memory for tpu_custom_call.1']
    %14 = vsyncpa [#allocation5], 0
    %s15 = scalar_lea.sflag [#allocation5], 1
    %16 = vsyncpa %s15, 0
    %17 = vsyncpa [#allocation7], 0
    %s18 = scalar_lea.sflag [#allocation7], 1
    %19 = vsyncpa %s18, 0
    %20 = vsyncpa [#allocation10], 0
    %21 = vsyncpa [#allocation13], 0
    loop: start=0, step=1, limit=4
    $region2: #{tpu_custom_call.1} parent=1 // loop_pre_header
      _
    $region3: #{tpu_custom_call.1} parent=1 // loop_header
      %s23 = sphi 0, %s27
      %p24 = scmp.ge.s32.totalorder %s23, 4
      %s33 = sphi 0, %s35
      %s36 = sphi 0, %s33
      %s37 = sphi 0, %s36
      %s53 = sphi 0, %s37
      %s59 = sphi 0, %s61
      %s62 = sphi 0, %s59
      %s63 = sphi 0, %s62
      %s79 = sphi 0, %s63
      %s83 = sphi 0, %s83
      %s85 = sphi 0, %s83
      %s86 = sphi 0, %s85
      %s100 = sphi 0, %s86
      %s104 = sphi 0, %s104
      %s106 = sphi 0, %s104
      %s107 = sphi 0, %s106
      %s121 = sphi 0, %s107
      %s125 = sphi 0, %s125
      %s127 = sphi 0, %s125
      %s128 = sphi 0, %s127
      %s142 = sphi 0, %s128
      %s146 = sphi 0, %s146
      %s148 = sphi 0, %s146
      %s149 = sphi 0, %s148
      %s163 = sphi 0, %s149
      %s167 = sphi 0, %s167
      %s169 = sphi 0, %s167
      %s170 = sphi 0, %s169
      %s184 = sphi 0, %s170
      %s188 = sphi 0, %s188
      %s190 = sphi 0, %s188
      %s191 = sphi 0, %s190
      %s205 = sphi 0, %s191
    $region4: #{tpu_custom_call.1} parent=1 // loop_header_branch
      %26 = sbr.rel (%p24) target = $region8
    $region5: #{tpu_custom_call.1} parent=1 // loop_body
      %s28 = ssub.s32 %s23, 1
      %s29 = ssub.s32 %s23, 2
      %s30 = sadd.s32 %s23, 1
      %s31 = ssub.s32 %s23, %s30
      %p32 = scmp.eq.s32.totalorder %s31, 0
      %s34 = sadd.s32 %s33, 1
      %s35 = scalar_select %p32, %s33, %s34
      %p38 = pneg %p32
      %p39 = scmp.eq.s32.totalorder %s23, 1
      %p40 = por %p38, %p39
      %p41 = scmp.ne.s32.totalorder %s33, %s36
      %p42 = scmp.eq.s32.totalorder %s23, 0
      %p43 = por %p41, %p42
      %p44 = scmp.ne.s32.totalorder %s33, %s36
      %p45 = scmp.eq.s32.totalorder %s28, 1
      %p46 = por %p44, %p45
      %p47 = scmp.ne.s32.totalorder %s36, %s37
      %p48 = scmp.eq.s32.totalorder %s28, 0
      %p49 = por %p47, %p48
      %p50 = scmp.ne.s32.totalorder %s36, %s37
      %p51 = scmp.eq.s32.totalorder %s29, 1
      %p52 = por %p50, %p51
      %p54 = scmp.ne.s32.totalorder %s37, %s53
      %p55 = scmp.eq.s32.totalorder %s29, 0
      %p56 = por %p54, %p55
      %s57 = ssub.s32 %s23, %s30
      %p58 = scmp.eq.s32.totalorder %s57, 0
      %s60 = sadd.s32 %s59, 1
      %s61 = scalar_select %p58, %s59, %s60
      %p64 = pneg %p58
      %p65 = scmp.eq.s32.totalorder %s23, 1
      %p66 = por %p64, %p65
      %p67 = scmp.ne.s32.totalorder %s59, %s62
      %p68 = scmp.eq.s32.totalorder %s23, 0
      %p69 = por %p67, %p68
      %p70 = scmp.ne.s32.totalorder %s59, %s62
      %p71 = scmp.eq.s32.totalorder %s28, 1
      %p72 = por %p70, %p71
      %p73 = scmp.ne.s32.totalorder %s62, %s63
      %p74 = scmp.eq.s32.totalorder %s28, 0
      %p75 = por %p73, %p74
      %p76 = scmp.ne.s32.totalorder %s62, %s63
      %p77 = scmp.eq.s32.totalorder %s29, 1
      %p78 = por %p76, %p77
      %p80 = scmp.ne.s32.totalorder %s63, %s79
      %p81 = scmp.eq.s32.totalorder %s29, 0
      %p82 = por %p80, %p81
      %s84 = sadd.s32 %s83, 1
      %p87 = scmp.eq.s32.totalorder %s23, 1
      %p88 = scmp.ne.s32.totalorder %s83, %s85
      %p89 = scmp.eq.s32.totalorder %s23, 0
      %p90 = por %p88, %p89
      %p91 = scmp.ne.s32.totalorder %s83, %s85
      %p92 = scmp.eq.s32.totalorder %s28, 1
      %p93 = por %p91, %p92
      %p94 = scmp.ne.s32.totalorder %s85, %s86
      %p95 = scmp.eq.s32.totalorder %s28, 0
      %p96 = por %p94, %p95
      %p97 = scmp.ne.s32.totalorder %s85, %s86
      %p98 = scmp.eq.s32.totalorder %s29, 1
      %p99 = por %p97, %p98
      %p101 = scmp.ne.s32.totalorder %s86, %s100
      %p102 = scmp.eq.s32.totalorder %s29, 0
      %p103 = por %p101, %p102
      %s105 = sadd.s32 %s104, 1
      %p108 = scmp.eq.s32.totalorder %s23, 1
      %p109 = scmp.ne.s32.totalorder %s104, %s106
      %p110 = scmp.eq.s32.totalorder %s23, 0
      %p111 = por %p109, %p110
      %p112 = scmp.ne.s32.totalorder %s104, %s106
      %p113 = scmp.eq.s32.totalorder %s28, 1
      %p114 = por %p112, %p113
      %p115 = scmp.ne.s32.totalorder %s106, %s107
      %p116 = scmp.eq.s32.totalorder %s28, 0
      %p117 = por %p115, %p116
      %p118 = scmp.ne.s32.totalorder %s106, %s107
      %p119 = scmp.eq.s32.totalorder %s29, 1
      %p120 = por %p118, %p119
      %p122 = scmp.ne.s32.totalorder %s107, %s121
      %p123 = scmp.eq.s32.totalorder %s29, 0
      %p124 = por %p122, %p123
      %s126 = sadd.s32 %s125, 1
      %p129 = scmp.eq.s32.totalorder %s23, 1
      %p130 = scmp.ne.s32.totalorder %s125, %s127
      %p131 = scmp.eq.s32.totalorder %s23, 0
      %p132 = por %p130, %p131
      %p133 = scmp.ne.s32.totalorder %s125, %s127
      %p134 = scmp.eq.s32.totalorder %s28, 1
      %p135 = por %p133, %p134
      %p136 = scmp.ne.s32.totalorder %s127, %s128
      %p137 = scmp.eq.s32.totalorder %s28, 0
      %p138 = por %p136, %p137
      %p139 = scmp.ne.s32.totalorder %s127, %s128
      %p140 = scmp.eq.s32.totalorder %s29, 1
      %p141 = por %p139, %p140
      %p143 = scmp.ne.s32.totalorder %s128, %s142
      %p144 = scmp.eq.s32.totalorder %s29, 0
      %p145 = por %p143, %p144
      %s147 = sadd.s32 %s146, 1
      %p150 = scmp.eq.s32.totalorder %s23, 1
      %p151 = scmp.ne.s32.totalorder %s146, %s148
      %p152 = scmp.eq.s32.totalorder %s23, 0
      %p153 = por %p151, %p152
      %p154 = scmp.ne.s32.totalorder %s146, %s148
      %p155 = scmp.eq.s32.totalorder %s28, 1
      %p156 = por %p154, %p155
      %p157 = scmp.ne.s32.totalorder %s148, %s149
      %p158 = scmp.eq.s32.totalorder %s28, 0
      %p159 = por %p157, %p158
      %p160 = scmp.ne.s32.totalorder %s148, %s149
      %p161 = scmp.eq.s32.totalorder %s29, 1
      %p162 = por %p160, %p161
      %p164 = scmp.ne.s32.totalorder %s149, %s163
      %p165 = scmp.eq.s32.totalorder %s29, 0
      %p166 = por %p164, %p165
      %s168 = sadd.s32 %s167, 1
      %p171 = scmp.eq.s32.totalorder %s23, 1
      %p172 = scmp.ne.s32.totalorder %s167, %s169
      %p173 = scmp.eq.s32.totalorder %s23, 0
      %p174 = por %p172, %p173
      %p175 = scmp.ne.s32.totalorder %s167, %s169
      %p176 = scmp.eq.s32.totalorder %s28, 1
      %p177 = por %p175, %p176
      %p178 = scmp.ne.s32.totalorder %s169, %s170
      %p179 = scmp.eq.s32.totalorder %s28, 0
      %p180 = por %p178, %p179
      %p181 = scmp.ne.s32.totalorder %s169, %s170
      %p182 = scmp.eq.s32.totalorder %s29, 1
      %p183 = por %p181, %p182
      %p185 = scmp.ne.s32.totalorder %s170, %s184
      %p186 = scmp.eq.s32.totalorder %s29, 0
      %p187 = por %p185, %p186
      %s189 = sadd.s32 %s188, 1
      %p192 = scmp.eq.s32.totalorder %s23, 1
      %p193 = scmp.ne.s32.totalorder %s188, %s190
      %p194 = scmp.eq.s32.totalorder %s23, 0
      %p195 = por %p193, %p194
      %p196 = scmp.ne.s32.totalorder %s188, %s190
      %p197 = scmp.eq.s32.totalorder %s28, 1
      %p198 = por %p196, %p197
      %p199 = scmp.ne.s32.totalorder %s190, %s191
      %p200 = scmp.eq.s32.totalorder %s28, 0
      %p201 = por %p199, %p200
      %p202 = scmp.ne.s32.totalorder %s190, %s191
      %p203 = scmp.eq.s32.totalorder %s29, 1
      %p204 = por %p202, %p203
      %p206 = scmp.ne.s32.totalorder %s191, %s205
      %p207 = scmp.eq.s32.totalorder %s29, 0
      %p208 = por %p206, %p207
      %p209 = scmp.le.s32.totalorder 1, %s23
      %p210 = scmp.lt.s32.totalorder %s23, 3
      %p211 = pnand %p209, %p210
      %p212 = pneg %p211
      // Predicated region
      $region9: #{tpu_custom_call.1} parent=5 // pred_check
        _
      $region10: #{tpu_custom_call.1} parent=5 // pred_check_branch
        %214 = sbr.rel (%p211) target = $region12
      $region11: #{tpu_custom_call.1} parent=5 // pred_region
        %s215 = ssub.s32 %s23, 1
        // Predicated region
        $region13: #{tpu_custom_call.1} parent=11 // pred_check
          %p216 = pneg %p96
        $region14: #{tpu_custom_call.1} parent=11 // pred_check_branch
          %218 = sbr.rel (%p216) target = $region16
        $region15: #{tpu_custom_call.1} parent=11 // pred_region
          %s220 = ssub.s32 64, 64
          %221 = vsyncadd [#allocation7], %s220
          %s223 = sshll.u32 [#allocation8], 4
          %s224 = int_to_ptr.vmem [resolvable:$true] %s223
          %226 = dma.hbm_to_vmem [thread:$0]  %s2, 64, %s224, [#allocation7]
        $region16: #{tpu_custom_call.1} parent=11 // pred_fallthru
          _
        // Predicated region
        $region17: #{tpu_custom_call.1} parent=11 // pred_check
          %p227 = pneg %p117
        $region18: #{tpu_custom_call.1} parent=11 // pred_check_branch
          %229 = sbr.rel (%p227) target = $region20
        $region19: #{tpu_custom_call.1} parent=11 // pred_region
          %s231 = ssub.s32 8192, 8192
          %232 = vsyncadd [#allocation10], %s231
          %s233 = sshll.u32 [#allocation9], 4
          %s234 = int_to_ptr.vmem [resolvable:$true] %s233
          %239 = dma.hbm_to_vmem [thread:$0]  %s3, 8192, %s234, [#allocation10], 128, 128, 8
        $region20: #{tpu_custom_call.1} parent=11 // pred_fallthru
          _
        // Predicated region
        $region21: #{tpu_custom_call.1} parent=11 // pred_check
          %p240 = pneg %p138
        $region22: #{tpu_custom_call.1} parent=11 // pred_check_branch
          %242 = sbr.rel (%p240) target = $region24
        $region23: #{tpu_custom_call.1} parent=11 // pred_region
          %s244 = ssub.s32 32, 32
          %245 = vsyncadd [#allocation10], %s244
          %s247 = sshll.u32 [#allocation11], 4
          %s248 = int_to_ptr.vmem [resolvable:$true] %s247
          %250 = dma.hbm_to_vmem [thread:$0]  %s4, 32, %s248, [#allocation10]
        $region24: #{tpu_custom_call.1} parent=11 // pred_fallthru
          _
        // Predicated region
        $region25: #{tpu_custom_call.1} parent=11 // pred_check
          %p251 = pneg %p159
        $region26: #{tpu_custom_call.1} parent=11 // pred_check_branch
          %253 = sbr.rel (%p251) target = $region28
        $region27: #{tpu_custom_call.1} parent=11 // pred_region
          %s255 = ssub.s32 32, 32
          %256 = vsyncadd [#allocation13], %s255
          %s258 = sshll.u32 [#allocation12], 4
          %s259 = int_to_ptr.vmem [resolvable:$true] %s258
          %261 = dma.hbm_to_vmem [thread:$0]  %s5, 32, %s259, [#allocation13]
        $region28: #{tpu_custom_call.1} parent=11 // pred_fallthru
          _
        // Predicated region
        $region29: #{tpu_custom_call.1} parent=11 // pred_check
          %p262 = pneg %p180
        $region30: #{tpu_custom_call.1} parent=11 // pred_check_branch
          %264 = sbr.rel (%p262) target = $region32
        $region31: #{tpu_custom_call.1} parent=11 // pred_region
          _
        $region32: #{tpu_custom_call.1} parent=11 // pred_fallthru
          _
      $region12: #{tpu_custom_call.1} parent=5 // pred_fallthru
        _
      %p265 = scmp.lt.s32.totalorder %s23, 2
      // Predicated region
      $region33: #{tpu_custom_call.1} parent=5 // pred_check
        %p266 = pneg %p265
      $region34: #{tpu_custom_call.1} parent=5 // pred_check_branch
        %268 = sbr.rel (%p266) target = $region36
      $region35: #{tpu_custom_call.1} parent=5 // pred_region
        // Predicated region
        $region37: #{tpu_custom_call.1} parent=35 // pred_check
          %p269 = pneg %p43
        $region38: #{tpu_custom_call.1} parent=35 // pred_check_branch
          %271 = sbr.rel (%p269) target = $region40
        $region39: #{tpu_custom_call.1} parent=35 // pred_region
          %s272 = sand.u32 %s33, 1
          %s273 = scalar_lea.sflag [#allocation5], %s272
          %s274 = sand.u32 %s33, 1
          %s275 = smul.addr %s274, 12
          %s276 = scalar_lea.vmem [#allocation4], %s275
          %s277 = smul.u32 6, %s23
          %s279 = ssub.s32 192, 192
          %280 = vsyncadd %s273, %s279
          %s281 = smul.addr %s277, 32
          %s282 = scalar_lea.hbm %s0, %s281
          %s284 = sshll.u32 %s276, 4
          %s285 = int_to_ptr.vmem [resolvable:$true] %s284
          %287 = dma.hbm_to_vmem [thread:$0]  %s282, 192, %s285, %s273
        $region40: #{tpu_custom_call.1} parent=35 // pred_fallthru
          _
        // Predicated region
        $region41: #{tpu_custom_call.1} parent=35 // pred_check
          %p288 = pneg %p69
        $region42: #{tpu_custom_call.1} parent=35 // pred_check_branch
          %290 = sbr.rel (%p288) target = $region44
        $region43: #{tpu_custom_call.1} parent=35 // pred_region
          %s291 = sand.u32 %s23, 1
          %s292 = scalar_lea.sflag [#allocation7], %s291
          %s293 = sand.u32 %s59, 1
          %s294 = smul.addr %s293, 1536
          %s295 = scalar_lea.vmem [#allocation6], %s294
          %s296 = smul.u32 96, %s23
          %s298 = ssub.s32 24576, 24576
          %299 = vsyncadd %s292, %s298
          %s300 = smul.addr %s296, 4
          %s301 = smul.addr %s300, 64
          %s302 = scalar_lea.hbm %s1, %s301
          %s303 = sshll.u32 %s295, 4
          %s304 = int_to_ptr.vmem [resolvable:$true] %s303
          %309 = dma.hbm_to_vmem [thread:$0]  %s302, 24576, %s304, %s292, 256, 256, 16
        $region44: #{tpu_custom_call.1} parent=35 // pred_fallthru
          _
      $region36: #{tpu_custom_call.1} parent=5 // pred_fallthru
        _
      %p310 = scmp.le.s32.totalorder 1, %s23
      %p311 = scmp.lt.s32.totalorder %s23, 3
      %p312 = pnand %p310, %p311
      %p313 = pneg %p312
      // Predicated region
      $region45: #{tpu_custom_call.1} parent=5 // pred_check
        _
      $region46: #{tpu_custom_call.1} parent=5 // pred_check_branch
        %315 = sbr.rel (%p312) target = $region48
      $region47: #{tpu_custom_call.1} parent=5 // pred_region
        %s316 = ssub.s32 %s23, 1
        %s317 = sand.u32 %s36, 1
        %s318 = scalar_lea.sflag [#allocation5], %s317
        %s319 = sand.u32 %s36, 1
        %s320 = smul.addr %s319, 12
        %s321 = scalar_lea.vmem [#allocation4], %s320
        // Predicated region
        $region49: #{tpu_custom_call.1} parent=47 // pred_check
          %p322 = pneg %p49
        $region50: #{tpu_custom_call.1} parent=47 // pred_check_branch
          %324 = sbr.rel (%p322) target = $region52
        $region51: #{tpu_custom_call.1} parent=47 // pred_region
          %325 = dma.done %s318, 192
        $region52: #{tpu_custom_call.1} parent=47 // pred_fallthru
          _
        %s326 = sand.u32 %s28, 1
        %s327 = scalar_lea.sflag [#allocation7], %s326
        %s328 = sand.u32 %s62, 1
        %s329 = smul.addr %s328, 1536
        %s330 = scalar_lea.vmem [#allocation6], %s329
        // Predicated region
        $region53: #{tpu_custom_call.1} parent=47 // pred_check
          %p331 = pneg %p75
        $region54: #{tpu_custom_call.1} parent=47 // pred_check_branch
          %333 = sbr.rel (%p331) target = $region56
        $region55: #{tpu_custom_call.1} parent=47 // pred_region
          %334 = dma.done %s327, 24576
        $region56: #{tpu_custom_call.1} parent=47 // pred_fallthru
          _
        // Predicated region
        $region57: #{tpu_custom_call.1} parent=47 // pred_check
          %p335 = pneg %p96
        $region58: #{tpu_custom_call.1} parent=47 // pred_check_branch
          %337 = sbr.rel (%p335) target = $region60
        $region59: #{tpu_custom_call.1} parent=47 // pred_region
          %338 = dma.done [#allocation7], 64
        $region60: #{tpu_custom_call.1} parent=47 // pred_fallthru
          _
        // Predicated region
        $region61: #{tpu_custom_call.1} parent=47 // pred_check
          %p339 = pneg %p117
        $region62: #{tpu_custom_call.1} parent=47 // pred_check_branch
          %341 = sbr.rel (%p339) target = $region64
        $region63: #{tpu_custom_call.1} parent=47 // pred_region
          %342 = dma.done [#allocation10], 8192
        $region64: #{tpu_custom_call.1} parent=47 // pred_fallthru
          _
        // Predicated region
        $region65: #{tpu_custom_call.1} parent=47 // pred_check
          %p343 = pneg %p138
        $region66: #{tpu_custom_call.1} parent=47 // pred_check_branch
          %345 = sbr.rel (%p343) target = $region68
        $region67: #{tpu_custom_call.1} parent=47 // pred_region
          %346 = dma.done [#allocation10], 32
        $region68: #{tpu_custom_call.1} parent=47 // pred_fallthru
          _
        // Predicated region
        $region69: #{tpu_custom_call.1} parent=47 // pred_check
          %p347 = pneg %p159
        $region70: #{tpu_custom_call.1} parent=47 // pred_check_branch
          %349 = sbr.rel (%p347) target = $region72
        $region71: #{tpu_custom_call.1} parent=47 // pred_region
          %350 = dma.done [#allocation13], 32
        $region72: #{tpu_custom_call.1} parent=47 // pred_fallthru
          _
        %s351 = sand.u32 %s36, 1
        %s352 = scalar_lea.sflag [#allocation5], %s351
        %s353 = sand.u32 %s36, 1
        %s354 = smul.addr %s353, 12
        %s355 = scalar_lea.vmem [#allocation4], %s354
        %p356 = pneg %p49
        %p357 = pneg %p46
        %s358 = sand.u32 %s28, 1
        %s359 = scalar_lea.sflag [#allocation7], %s358
        %s360 = sand.u32 %s62, 1
        %s361 = smul.addr %s360, 1536
        %s362 = scalar_lea.vmem [#allocation6], %s361
        %p363 = pneg %p75
        %p364 = pneg %p72
        %p365 = pneg %p96
        %p366 = pneg %p93
        %p367 = pneg %p117
        %p368 = pneg %p114
        %p369 = pneg %p138
        %p370 = pneg %p135
        %p371 = pneg %p159
        %p372 = pneg %p156
        %p373 = pneg %p180
        %p374 = pneg %p177
        %p375 = pneg %p201
        %p376 = pneg %p198
        %s377 = smul.u32 6, %s28
        %s378 = smul.u32 96, %s28
        %p379 = scmp.eq.s32.totalorder %s28, 0
        // Predicated region
        $region73: #{tpu_custom_call.1} parent=47 // pred_check
          %p380 = pneg %p379
        $region74: #{tpu_custom_call.1} parent=47 // pred_check_branch
          %382 = sbr.rel (%p380) target = $region76
        $region75: #{tpu_custom_call.1} parent=47 // pred_region
          %v383 = vld [vmem:[#allocation8] sm:$0xf]
          %v385 = vlaneseq
          %v386 = vshrl.u32 %v385, 7
          %v387 = vsub.s32 0, %v386
          %v388 = vrot.slane %v383, %v387
          %v389 = vlaneseq
          %v390 = vshrl.u32 %v389, 7
          %v391 = vsub.s32 1, %v390
          %v392 = vrot.slane %v383, %v391
          %v393 = vlaneseq
          %v394 = vshrl.u32 %v393, 7
          %v395 = vsub.s32 2, %v394
          %v396 = vrot.slane %v383, %v395
          %v397 = vlaneseq
          %v398 = vshrl.u32 %v397, 7
          %v399 = vsub.s32 3, %v398
          %v400 = vrot.slane %v383, %v399
          %v401 = vcombine.low %v388, %v392
          %v402 = vcombine.low %v396, %v400
          %v404 = vunpack.c.l.s4 1983009808
          %v405 = vunpack.c.0.s8 %v404
          %v406 = vlaneseq
          %v407 = vshrl.u32 %v406, 7
          %v408 = vsub.s32 %v405, %v407
          %v409 = vrot.slane %v401, %v408
          %v411 = vunpack.c.l.s4 1983009808
          %v412 = vunpack.c.0.s8 %v411
          %v413 = vlaneseq
          %v414 = vshrl.u32 %v413, 7
          %v415 = vsub.s32 %v412, %v414
          %v416 = vrot.slane %v402, %v415
          %v417 = vcombine.low %v409, %v416
          %419 = vst [vmem:[#allocation2] sm:$0xff] %v417
        $region76: #{tpu_custom_call.1} parent=47 // pred_fallthru
          _
        %v420 = vld [vmem:[#allocation2] sm:$0xff]
        %v421 = vld [vmem:[%s321] sm:$0xff]
        %v422 = vld [vmem:[%s321 + $0x8] sm:$0xf]
        %v425 = vcombine.high %v421, %v421
        %v427 = vunpack.c.l.s4 1983009808
        %v428 = vunpack.c.0.s8 %v427
        %v429 = vlaneseq
        %v430 = vshrl.u32 %v429, 7
        %v431 = vsub.s32 %v428, %v430
        %v432 = vrot.slane %v421, %v431
        %v434 = vunpack.c.l.s4 1983009808
        %v435 = vunpack.c.0.s8 %v434
        %v436 = vlaneseq
        %v437 = vshrl.u32 %v436, 7
        %v438 = vsub.s32 %v435, %v437
        %v439 = vrot.slane %v425, %v438
        %v440 = vcombine.high %v432, %v432
        %v441 = vcombine.high %v439, %v439
        %v443 = vunpack.c.l.s4 1983009808
        %v444 = vunpack.c.0.s8 %v443
        %v445 = vlaneseq
        %v446 = vshrl.u32 %v445, 7
        %v447 = vsub.s32 %v444, %v446
        %v448 = vrot.slane %v422, %v447
        %v449 = vcombine.high %v448, %v448
        %v456 = vpack.c.bf16 %v432, %v432
        %v457 = vpack.c.bf16 %v440, %v440
        %v458 = vpack.c.bf16 %v439, %v439
        %v459 = vpack.c.bf16 %v441, %v441
        %v460 = vpack.c.bf16 %v448, %v448
        %v461 = vpack.c.bf16 %v449, %v449
        %v462 = vld [vmem:[%s330] sm:$0xff]
        %v463 = vld [vmem:[%s330 + $0x8] sm:$0xff]
        %v464 = vld [vmem:[%s330 + $0x10] sm:$0xff]
        %v465 = vld [vmem:[%s330 + $0x18] sm:$0xff]
        %v466 = vld [vmem:[%s330 + $0x20] sm:$0xff]
        %v467 = vld [vmem:[%s330 + $0x28] sm:$0xff]
        %v468 = vld [vmem:[%s330 + $0x30] sm:$0xff]
        %v469 = vld [vmem:[%s330 + $0x38] sm:$0xff]
        %v470 = vld [vmem:[%s330 + $0x40] sm:$0xff]
        %v471 = vld [vmem:[%s330 + $0x48] sm:$0xff]
        %v472 = vld [vmem:[%s330 + $0x50] sm:$0xff]
        %v473 = vld [vmem:[%s330 + $0x58] sm:$0xff]
        %v474 = vld [vmem:[%s330 + $0x60] sm:$0xff]
        %v475 = vld [vmem:[%s330 + $0x68] sm:$0xff]
        %v476 = vld [vmem:[%s330 + $0x70] sm:$0xff]
        %v477 = vld [vmem:[%s330 + $0x78] sm:$0xff]
        %v478 = vld [vmem:[%s330 + $0x80] sm:$0xff]
        %v479 = vld [vmem:[%s330 + $0x88] sm:$0xff]
        %v480 = vld [vmem:[%s330 + $0x90] sm:$0xff]
        %v481 = vld [vmem:[%s330 + $0x98] sm:$0xff]
        %v482 = vld [vmem:[%s330 + $0xa0] sm:$0xff]
        %v483 = vld [vmem:[%s330 + $0xa8] sm:$0xff]
        %v484 = vld [vmem:[%s330 + $0xb0] sm:$0xff]
        %v485 = vld [vmem:[%s330 + $0xb8] sm:$0xff]
        %v486 = vld [vmem:[%s330 + $0xc0] sm:$0xff]
        %v487 = vld [vmem:[%s330 + $0xc8] sm:$0xff]
        %v488 = vld [vmem:[%s330 + $0xd0] sm:$0xff]
        %v489 = vld [vmem:[%s330 + $0xd8] sm:$0xff]
        %v490 = vld [vmem:[%s330 + $0xe0] sm:$0xff]
        %v491 = vld [vmem:[%s330 + $0xe8] sm:$0xff]
        %v492 = vld [vmem:[%s330 + $0xf0] sm:$0xff]
        %v493 = vld [vmem:[%s330 + $0xf8] sm:$0xff]
        %v494 = vld [vmem:[%s330 + $0x100] sm:$0xff]
        %v495 = vld [vmem:[%s330 + $0x108] sm:$0xff]
        %v496 = vld [vmem:[%s330 + $0x110] sm:$0xff]
        %v497 = vld [vmem:[%s330 + $0x118] sm:$0xff]
        %v498 = vld [vmem:[%s330 + $0x120] sm:$0xff]
        %v499 = vld [vmem:[%s330 + $0x128] sm:$0xff]
        %v500 = vld [vmem:[%s330 + $0x130] sm:$0xff]
        %v501 = vld [vmem:[%s330 + $0x138] sm:$0xff]
        %v502 = vld [vmem:[%s330 + $0x140] sm:$0xff]
        %v503 = vld [vmem:[%s330 + $0x148] sm:$0xff]
        %v504 = vld [vmem:[%s330 + $0x150] sm:$0xff]
        %v505 = vld [vmem:[%s330 + $0x158] sm:$0xff]
        %v506 = vld [vmem:[%s330 + $0x160] sm:$0xff]
        %v507 = vld [vmem:[%s330 + $0x168] sm:$0xff]
        %v508 = vld [vmem:[%s330 + $0x170] sm:$0xff]
        %v509 = vld [vmem:[%s330 + $0x178] sm:$0xff]
        %v510 = vld [vmem:[%s330 + $0x180] sm:$0xff]
        %v511 = vld [vmem:[%s330 + $0x188] sm:$0xff]
        %v512 = vld [vmem:[%s330 + $0x190] sm:$0xff]
        %v513 = vld [vmem:[%s330 + $0x198] sm:$0xff]
        %v514 = vld [vmem:[%s330 + $0x1a0] sm:$0xff]
        %v515 = vld [vmem:[%s330 + $0x1a8] sm:$0xff]
        %v516 = vld [vmem:[%s330 + $0x1b0] sm:$0xff]
        %v517 = vld [vmem:[%s330 + $0x1b8] sm:$0xff]
        %v518 = vld [vmem:[%s330 + $0x1c0] sm:$0xff]
        %v519 = vld [vmem:[%s330 + $0x1c8] sm:$0xff]
        %v520 = vld [vmem:[%s330 + $0x1d0] sm:$0xff]
        %v521 = vld [vmem:[%s330 + $0x1d8] sm:$0xff]
        %v522 = vld [vmem:[%s330 + $0x1e0] sm:$0xff]
        %v523 = vld [vmem:[%s330 + $0x1e8] sm:$0xff]
        %v524 = vld [vmem:[%s330 + $0x1f0] sm:$0xff]
        %v525 = vld [vmem:[%s330 + $0x1f8] sm:$0xff]
        %v526 = vld [vmem:[%s330 + $0x200] sm:$0xff]
        %v527 = vld [vmem:[%s330 + $0x208] sm:$0xff]
        %v528 = vld [vmem:[%s330 + $0x210] sm:$0xff]
        %v529 = vld [vmem:[%s330 + $0x218] sm:$0xff]
        %v530 = vld [vmem:[%s330 + $0x220] sm:$0xff]
        %v531 = vld [vmem:[%s330 + $0x228] sm:$0xff]
        %v532 = vld [vmem:[%s330 + $0x230] sm:$0xff]
        %v533 = vld [vmem:[%s330 + $0x238] sm:$0xff]
        %v534 = vld [vmem:[%s330 + $0x240] sm:$0xff]
        %v535 = vld [vmem:[%s330 + $0x248] sm:$0xff]
        %v536 = vld [vmem:[%s330 + $0x250] sm:$0xff]
        %v537 = vld [vmem:[%s330 + $0x258] sm:$0xff]
        %v538 = vld [vmem:[%s330 + $0x260] sm:$0xff]
        %v539 = vld [vmem:[%s330 + $0x268] sm:$0xff]
        %v540 = vld [vmem:[%s330 + $0x270] sm:$0xff]
        %v541 = vld [vmem:[%s330 + $0x278] sm:$0xff]
        %v542 = vld [vmem:[%s330 + $0x280] sm:$0xff]
        %v543 = vld [vmem:[%s330 + $0x288] sm:$0xff]
        %v544 = vld [vmem:[%s330 + $0x290] sm:$0xff]
        %v545 = vld [vmem:[%s330 + $0x298] sm:$0xff]
        %v546 = vld [vmem:[%s330 + $0x2a0] sm:$0xff]
        %v547 = vld [vmem:[%s330 + $0x2a8] sm:$0xff]
        %v548 = vld [vmem:[%s330 + $0x2b0] sm:$0xff]
        %v549 = vld [vmem:[%s330 + $0x2b8] sm:$0xff]
        %v550 = vld [vmem:[%s330 + $0x2c0] sm:$0xff]
        %v551 = vld [vmem:[%s330 + $0x2c8] sm:$0xff]
        %v552 = vld [vmem:[%s330 + $0x2d0] sm:$0xff]
        %v553 = vld [vmem:[%s330 + $0x2d8] sm:$0xff]
        %v554 = vld [vmem:[%s330 + $0x2e0] sm:$0xff]
        %v555 = vld [vmem:[%s330 + $0x2e8] sm:$0xff]
        %v556 = vld [vmem:[%s330 + $0x2f0] sm:$0xff]
        %v557 = vld [vmem:[%s330 + $0x2f8] sm:$0xff]
        %v558 = vld [vmem:[%s330 + $0x300] sm:$0xff]
        %v559 = vld [vmem:[%s330 + $0x308] sm:$0xff]
        %v560 = vld [vmem:[%s330 + $0x310] sm:$0xff]
        %v561 = vld [vmem:[%s330 + $0x318] sm:$0xff]
        %v562 = vld [vmem:[%s330 + $0x320] sm:$0xff]
        %v563 = vld [vmem:[%s330 + $0x328] sm:$0xff]
        %v564 = vld [vmem:[%s330 + $0x330] sm:$0xff]
        %v565 = vld [vmem:[%s330 + $0x338] sm:$0xff]
        %v566 = vld [vmem:[%s330 + $0x340] sm:$0xff]
        %v567 = vld [vmem:[%s330 + $0x348] sm:$0xff]
        %v568 = vld [vmem:[%s330 + $0x350] sm:$0xff]
        %v569 = vld [vmem:[%s330 + $0x358] sm:$0xff]
        %v570 = vld [vmem:[%s330 + $0x360] sm:$0xff]
        %v571 = vld [vmem:[%s330 + $0x368] sm:$0xff]
        %v572 = vld [vmem:[%s330 + $0x370] sm:$0xff]
        %v573 = vld [vmem:[%s330 + $0x378] sm:$0xff]
        %v574 = vld [vmem:[%s330 + $0x380] sm:$0xff]
        %v575 = vld [vmem:[%s330 + $0x388] sm:$0xff]
        %v576 = vld [vmem:[%s330 + $0x390] sm:$0xff]
        %v577 = vld [vmem:[%s330 + $0x398] sm:$0xff]
        %v578 = vld [vmem:[%s330 + $0x3a0] sm:$0xff]
        %v579 = vld [vmem:[%s330 + $0x3a8] sm:$0xff]
        %v580 = vld [vmem:[%s330 + $0x3b0] sm:$0xff]
        %v581 = vld [vmem:[%s330 + $0x3b8] sm:$0xff]
        %v582 = vld [vmem:[%s330 + $0x3c0] sm:$0xff]
        %v583 = vld [vmem:[%s330 + $0x3c8] sm:$0xff]
        %v584 = vld [vmem:[%s330 + $0x3d0] sm:$0xff]
        %v585 = vld [vmem:[%s330 + $0x3d8] sm:$0xff]
        %v586 = vld [vmem:[%s330 + $0x3e0] sm:$0xff]
        %v587 = vld [vmem:[%s330 + $0x3e8] sm:$0xff]
        %v588 = vld [vmem:[%s330 + $0x3f0] sm:$0xff]
        %v589 = vld [vmem:[%s330 + $0x3f8] sm:$0xff]
        %v590 = vld [vmem:[%s330 + $0x400] sm:$0xff]
        %v591 = vld [vmem:[%s330 + $0x408] sm:$0xff]
        %v592 = vld [vmem:[%s330 + $0x410] sm:$0xff]
        %v593 = vld [vmem:[%s330 + $0x418] sm:$0xff]
        %v594 = vld [vmem:[%s330 + $0x420] sm:$0xff]
        %v595 = vld [vmem:[%s330 + $0x428] sm:$0xff]
        %v596 = vld [vmem:[%s330 + $0x430] sm:$0xff]
        %v597 = vld [vmem:[%s330 + $0x438] sm:$0xff]
        %v598 = vld [vmem:[%s330 + $0x440] sm:$0xff]
        %v599 = vld [vmem:[%s330 + $0x448] sm:$0xff]
        %v600 = vld [vmem:[%s330 + $0x450] sm:$0xff]
        %v601 = vld [vmem:[%s330 + $0x458] sm:$0xff]
        %v602 = vld [vmem:[%s330 + $0x460] sm:$0xff]
        %v603 = vld [vmem:[%s330 + $0x468] sm:$0xff]
        %v604 = vld [vmem:[%s330 + $0x470] sm:$0xff]
        %v605 = vld [vmem:[%s330 + $0x478] sm:$0xff]
        %v606 = vld [vmem:[%s330 + $0x480] sm:$0xff]
        %v607 = vld [vmem:[%s330 + $0x488] sm:$0xff]
        %v608 = vld [vmem:[%s330 + $0x490] sm:$0xff]
        %v609 = vld [vmem:[%s330 + $0x498] sm:$0xff]
        %v610 = vld [vmem:[%s330 + $0x4a0] sm:$0xff]
        %v611 = vld [vmem:[%s330 + $0x4a8] sm:$0xff]
        %v612 = vld [vmem:[%s330 + $0x4b0] sm:$0xff]
        %v613 = vld [vmem:[%s330 + $0x4b8] sm:$0xff]
        %v614 = vld [vmem:[%s330 + $0x4c0] sm:$0xff]
        %v615 = vld [vmem:[%s330 + $0x4c8] sm:$0xff]
        %v616 = vld [vmem:[%s330 + $0x4d0] sm:$0xff]
        %v617 = vld [vmem:[%s330 + $0x4d8] sm:$0xff]
        %v618 = vld [vmem:[%s330 + $0x4e0] sm:$0xff]
        %v619 = vld [vmem:[%s330 + $0x4e8] sm:$0xff]
        %v620 = vld [vmem:[%s330 + $0x4f0] sm:$0xff]
        %v621 = vld [vmem:[%s330 + $0x4f8] sm:$0xff]
        %v622 = vld [vmem:[%s330 + $0x500] sm:$0xff]
        %v623 = vld [vmem:[%s330 + $0x508] sm:$0xff]
        %v624 = vld [vmem:[%s330 + $0x510] sm:$0xff]
        %v625 = vld [vmem:[%s330 + $0x518] sm:$0xff]
        %v626 = vld [vmem:[%s330 + $0x520] sm:$0xff]
        %v627 = vld [vmem:[%s330 + $0x528] sm:$0xff]
        %v628 = vld [vmem:[%s330 + $0x530] sm:$0xff]
        %v629 = vld [vmem:[%s330 + $0x538] sm:$0xff]
        %v630 = vld [vmem:[%s330 + $0x540] sm:$0xff]
        %v631 = vld [vmem:[%s330 + $0x548] sm:$0xff]
        %v632 = vld [vmem:[%s330 + $0x550] sm:$0xff]
        %v633 = vld [vmem:[%s330 + $0x558] sm:$0xff]
        %v634 = vld [vmem:[%s330 + $0x560] sm:$0xff]
        %v635 = vld [vmem:[%s330 + $0x568] sm:$0xff]
        %v636 = vld [vmem:[%s330 + $0x570] sm:$0xff]
        %v637 = vld [vmem:[%s330 + $0x578] sm:$0xff]
        %v638 = vld [vmem:[%s330 + $0x580] sm:$0xff]
        %v639 = vld [vmem:[%s330 + $0x588] sm:$0xff]
        %v640 = vld [vmem:[%s330 + $0x590] sm:$0xff]
        %v641 = vld [vmem:[%s330 + $0x598] sm:$0xff]
        %v642 = vld [vmem:[%s330 + $0x5a0] sm:$0xff]
        %v643 = vld [vmem:[%s330 + $0x5a8] sm:$0xff]
        %v644 = vld [vmem:[%s330 + $0x5b0] sm:$0xff]
        %v645 = vld [vmem:[%s330 + $0x5b8] sm:$0xff]
        %v646 = vld [vmem:[%s330 + $0x5c0] sm:$0xff]
        %v647 = vld [vmem:[%s330 + $0x5c8] sm:$0xff]
        %v648 = vld [vmem:[%s330 + $0x5d0] sm:$0xff]
        %v649 = vld [vmem:[%s330 + $0x5d8] sm:$0xff]
        %v650 = vld [vmem:[%s330 + $0x5e0] sm:$0xff]
        %v651 = vld [vmem:[%s330 + $0x5e8] sm:$0xff]
        %v652 = vld [vmem:[%s330 + $0x5f0] sm:$0xff]
        %v653 = vld [vmem:[%s330 + $0x5f8] sm:$0xff]
        %v846 = vunpack.c.l.b16 %v462
        %v847 = vunpack.c.h.b16 %v462
        %v848 = vunpack.c.l.b16 %v463
        %v849 = vunpack.c.h.b16 %v463
        %v850 = vunpack.c.l.b16 %v464
        %v851 = vunpack.c.h.b16 %v464
        %v852 = vunpack.c.l.b16 %v465
        %v853 = vunpack.c.h.b16 %v465
        %v854 = vunpack.c.l.b16 %v466
        %v855 = vunpack.c.h.b16 %v466
        %v856 = vunpack.c.l.b16 %v467
        %v857 = vunpack.c.h.b16 %v467
        %v858 = vunpack.c.l.b16 %v468
        %v859 = vunpack.c.h.b16 %v468
        %v860 = vunpack.c.l.b16 %v469
        %v861 = vunpack.c.h.b16 %v469
        %v862 = vunpack.c.l.b16 %v470
        %v863 = vunpack.c.h.b16 %v470
        %v864 = vunpack.c.l.b16 %v471
        %v865 = vunpack.c.h.b16 %v471
        %v866 = vunpack.c.l.b16 %v472
        %v867 = vunpack.c.h.b16 %v472
        %v868 = vunpack.c.l.b16 %v473
        %v869 = vunpack.c.h.b16 %v473
        %v870 = vunpack.c.l.b16 %v474
        %v871 = vunpack.c.h.b16 %v474
        %v872 = vunpack.c.l.b16 %v475
        %v873 = vunpack.c.h.b16 %v475
        %v874 = vunpack.c.l.b16 %v476
        %v875 = vunpack.c.h.b16 %v476
        %v876 = vunpack.c.l.b16 %v477
        %v877 = vunpack.c.h.b16 %v477
        %v878 = vunpack.c.l.b16 %v478
        %v879 = vunpack.c.h.b16 %v478
        %v880 = vunpack.c.l.b16 %v479
        %v881 = vunpack.c.h.b16 %v479
        %v882 = vunpack.c.l.b16 %v480
        %v883 = vunpack.c.h.b16 %v480
        %v884 = vunpack.c.l.b16 %v481
        %v885 = vunpack.c.h.b16 %v481
        %v886 = vunpack.c.l.b16 %v482
        %v887 = vunpack.c.h.b16 %v482
        %v888 = vunpack.c.l.b16 %v483
        %v889 = vunpack.c.h.b16 %v483
        %v890 = vunpack.c.l.b16 %v484
        %v891 = vunpack.c.h.b16 %v484
        %v892 = vunpack.c.l.b16 %v485
        %v893 = vunpack.c.h.b16 %v485
        %v894 = vunpack.c.l.b16 %v486
        %v895 = vunpack.c.h.b16 %v486
        %v896 = vunpack.c.l.b16 %v487
        %v897 = vunpack.c.h.b16 %v487
        %v898 = vunpack.c.l.b16 %v488
        %v899 = vunpack.c.h.b16 %v488
        %v900 = vunpack.c.l.b16 %v489
        %v901 = vunpack.c.h.b16 %v489
        %v902 = vunpack.c.l.b16 %v490
        %v903 = vunpack.c.h.b16 %v490
        %v904 = vunpack.c.l.b16 %v491
        %v905 = vunpack.c.h.b16 %v491
        %v906 = vunpack.c.l.b16 %v492
        %v907 = vunpack.c.h.b16 %v492
        %v908 = vunpack.c.l.b16 %v493
        %v909 = vunpack.c.h.b16 %v493
        %v910 = vunpack.c.l.b16 %v494
        %v911 = vunpack.c.h.b16 %v494
        %v912 = vunpack.c.l.b16 %v495
        %v913 = vunpack.c.h.b16 %v495
        %v914 = vunpack.c.l.b16 %v496
        %v915 = vunpack.c.h.b16 %v496
        %v916 = vunpack.c.l.b16 %v497
        %v917 = vunpack.c.h.b16 %v497
        %v918 = vunpack.c.l.b16 %v498
        %v919 = vunpack.c.h.b16 %v498
        %v920 = vunpack.c.l.b16 %v499
        %v921 = vunpack.c.h.b16 %v499
        %v922 = vunpack.c.l.b16 %v500
        %v923 = vunpack.c.h.b16 %v500
        %v924 = vunpack.c.l.b16 %v501
        %v925 = vunpack.c.h.b16 %v501
        %v926 = vunpack.c.l.b16 %v502
        %v927 = vunpack.c.h.b16 %v502
        %v928 = vunpack.c.l.b16 %v503
        %v929 = vunpack.c.h.b16 %v503
        %v930 = vunpack.c.l.b16 %v504
        %v931 = vunpack.c.h.b16 %v504
        %v932 = vunpack.c.l.b16 %v505
        %v933 = vunpack.c.h.b16 %v505
        %v934 = vunpack.c.l.b16 %v506
        %v935 = vunpack.c.h.b16 %v506
        %v936 = vunpack.c.l.b16 %v507
        %v937 = vunpack.c.h.b16 %v507
        %v938 = vunpack.c.l.b16 %v508
        %v939 = vunpack.c.h.b16 %v508
        %v940 = vunpack.c.l.b16 %v509
        %v941 = vunpack.c.h.b16 %v509
        %v942 = vunpack.c.l.b16 %v510
        %v943 = vunpack.c.h.b16 %v510
        %v944 = vunpack.c.l.b16 %v511
        %v945 = vunpack.c.h.b16 %v511
        %v946 = vunpack.c.l.b16 %v512
        %v947 = vunpack.c.h.b16 %v512
        %v948 = vunpack.c.l.b16 %v513
        %v949 = vunpack.c.h.b16 %v513
        %v950 = vunpack.c.l.b16 %v514
        %v951 = vunpack.c.h.b16 %v514
        %v952 = vunpack.c.l.b16 %v515
        %v953 = vunpack.c.h.b16 %v515
        %v954 = vunpack.c.l.b16 %v516
        %v955 = vunpack.c.h.b16 %v516
        %v956 = vunpack.c.l.b16 %v517
        %v957 = vunpack.c.h.b16 %v517
        %v958 = vunpack.c.l.b16 %v518
        %v959 = vunpack.c.h.b16 %v518
        %v960 = vunpack.c.l.b16 %v519
        %v961 = vunpack.c.h.b16 %v519
        %v962 = vunpack.c.l.b16 %v520
        %v963 = vunpack.c.h.b16 %v520
        %v964 = vunpack.c.l.b16 %v521
        %v965 = vunpack.c.h.b16 %v521
        %v966 = vunpack.c.l.b16 %v522
        %v967 = vunpack.c.h.b16 %v522
        %v968 = vunpack.c.l.b16 %v523
        %v969 = vunpack.c.h.b16 %v523
        %v970 = vunpack.c.l.b16 %v524
        %v971 = vunpack.c.h.b16 %v524
        %v972 = vunpack.c.l.b16 %v525
        %v973 = vunpack.c.h.b16 %v525
        %v974 = vunpack.c.l.b16 %v526
        %v975 = vunpack.c.h.b16 %v526
        %v976 = vunpack.c.l.b16 %v527
        %v977 = vunpack.c.h.b16 %v527
        %v978 = vunpack.c.l.b16 %v528
        %v979 = vunpack.c.h.b16 %v528
        %v980 = vunpack.c.l.b16 %v529
        %v981 = vunpack.c.h.b16 %v529
        %v982 = vunpack.c.l.b16 %v530
        %v983 = vunpack.c.h.b16 %v530
        %v984 = vunpack.c.l.b16 %v531
        %v985 = vunpack.c.h.b16 %v531
        %v986 = vunpack.c.l.b16 %v532
        %v987 = vunpack.c.h.b16 %v532
        %v988 = vunpack.c.l.b16 %v533
        %v989 = vunpack.c.h.b16 %v533
        %v990 = vunpack.c.l.b16 %v534
        %v991 = vunpack.c.h.b16 %v534
        %v992 = vunpack.c.l.b16 %v535
        %v993 = vunpack.c.h.b16 %v535
        %v994 = vunpack.c.l.b16 %v536
        %v995 = vunpack.c.h.b16 %v536
        %v996 = vunpack.c.l.b16 %v537
        %v997 = vunpack.c.h.b16 %v537
        %v998 = vunpack.c.l.b16 %v538
        %v999 = vunpack.c.h.b16 %v538
        %v1000 = vunpack.c.l.b16 %v539
        %v1001 = vunpack.c.h.b16 %v539
        %v1002 = vunpack.c.l.b16 %v540
        %v1003 = vunpack.c.h.b16 %v540
        %v1004 = vunpack.c.l.b16 %v541
        %v1005 = vunpack.c.h.b16 %v541
        %v1006 = vunpack.c.l.b16 %v542
        %v1007 = vunpack.c.h.b16 %v542
        %v1008 = vunpack.c.l.b16 %v543
        %v1009 = vunpack.c.h.b16 %v543
        %v1010 = vunpack.c.l.b16 %v544
        %v1011 = vunpack.c.h.b16 %v544
        %v1012 = vunpack.c.l.b16 %v545
        %v1013 = vunpack.c.h.b16 %v545
        %v1014 = vunpack.c.l.b16 %v546
        %v1015 = vunpack.c.h.b16 %v546
        %v1016 = vunpack.c.l.b16 %v547
        %v1017 = vunpack.c.h.b16 %v547
        %v1018 = vunpack.c.l.b16 %v548
        %v1019 = vunpack.c.h.b16 %v548
        %v1020 = vunpack.c.l.b16 %v549
        %v1021 = vunpack.c.h.b16 %v549
        %v1022 = vunpack.c.l.b16 %v550
        %v1023 = vunpack.c.h.b16 %v550
        %v1024 = vunpack.c.l.b16 %v551
        %v1025 = vunpack.c.h.b16 %v551
        %v1026 = vunpack.c.l.b16 %v552
        %v1027 = vunpack.c.h.b16 %v552
        %v1028 = vunpack.c.l.b16 %v553
        %v1029 = vunpack.c.h.b16 %v553
        %v1030 = vunpack.c.l.b16 %v554
        %v1031 = vunpack.c.h.b16 %v554
        %v1032 = vunpack.c.l.b16 %v555
        %v1033 = vunpack.c.h.b16 %v555
        %v1034 = vunpack.c.l.b16 %v556
        %v1035 = vunpack.c.h.b16 %v556
        %v1036 = vunpack.c.l.b16 %v557
        %v1037 = vunpack.c.h.b16 %v557
        %v1038 = vunpack.c.l.b16 %v558
        %v1039 = vunpack.c.h.b16 %v558
        %v1040 = vunpack.c.l.b16 %v559
        %v1041 = vunpack.c.h.b16 %v559
        %v1042 = vunpack.c.l.b16 %v560
        %v1043 = vunpack.c.h.b16 %v560
        %v1044 = vunpack.c.l.b16 %v561
        %v1045 = vunpack.c.h.b16 %v561
        %v1046 = vunpack.c.l.b16 %v562
        %v1047 = vunpack.c.h.b16 %v562
        %v1048 = vunpack.c.l.b16 %v563
        %v1049 = vunpack.c.h.b16 %v563
        %v1050 = vunpack.c.l.b16 %v564
        %v1051 = vunpack.c.h.b16 %v564
        %v1052 = vunpack.c.l.b16 %v565
        %v1053 = vunpack.c.h.b16 %v565
        %v1054 = vunpack.c.l.b16 %v566
        %v1055 = vunpack.c.h.b16 %v566
        %v1056 = vunpack.c.l.b16 %v567
        %v1057 = vunpack.c.h.b16 %v567
        %v1058 = vunpack.c.l.b16 %v568
        %v1059 = vunpack.c.h.b16 %v568
        %v1060 = vunpack.c.l.b16 %v569
        %v1061 = vunpack.c.h.b16 %v569
        %v1062 = vunpack.c.l.b16 %v570
        %v1063 = vunpack.c.h.b16 %v570
        %v1064 = vunpack.c.l.b16 %v571
        %v1065 = vunpack.c.h.b16 %v571
        %v1066 = vunpack.c.l.b16 %v572
        %v1067 = vunpack.c.h.b16 %v572
        %v1068 = vunpack.c.l.b16 %v573
        %v1069 = vunpack.c.h.b16 %v573
        %v1070 = vunpack.c.l.b16 %v574
        %v1071 = vunpack.c.h.b16 %v574
        %v1072 = vunpack.c.l.b16 %v575
        %v1073 = vunpack.c.h.b16 %v575
        %v1074 = vunpack.c.l.b16 %v576
        %v1075 = vunpack.c.h.b16 %v576
        %v1076 = vunpack.c.l.b16 %v577
        %v1077 = vunpack.c.h.b16 %v577
        %v1078 = vunpack.c.l.b16 %v578
        %v1079 = vunpack.c.h.b16 %v578
        %v1080 = vunpack.c.l.b16 %v579
        %v1081 = vunpack.c.h.b16 %v579
        %v1082 = vunpack.c.l.b16 %v580
        %v1083 = vunpack.c.h.b16 %v580
        %v1084 = vunpack.c.l.b16 %v581
        %v1085 = vunpack.c.h.b16 %v581
        %v1086 = vunpack.c.l.b16 %v582
        %v1087 = vunpack.c.h.b16 %v582
        %v1088 = vunpack.c.l.b16 %v583
        %v1089 = vunpack.c.h.b16 %v583
        %v1090 = vunpack.c.l.b16 %v584
        %v1091 = vunpack.c.h.b16 %v584
        %v1092 = vunpack.c.l.b16 %v585
        %v1093 = vunpack.c.h.b16 %v585
        %v1094 = vunpack.c.l.b16 %v586
        %v1095 = vunpack.c.h.b16 %v586
        %v1096 = vunpack.c.l.b16 %v587
        %v1097 = vunpack.c.h.b16 %v587
        %v1098 = vunpack.c.l.b16 %v588
        %v1099 = vunpack.c.h.b16 %v588
        %v1100 = vunpack.c.l.b16 %v589
        %v1101 = vunpack.c.h.b16 %v589
        %v1102 = vunpack.c.l.b16 %v590
        %v1103 = vunpack.c.h.b16 %v590
        %v1104 = vunpack.c.l.b16 %v591
        %v1105 = vunpack.c.h.b16 %v591
        %v1106 = vunpack.c.l.b16 %v592
        %v1107 = vunpack.c.h.b16 %v592
        %v1108 = vunpack.c.l.b16 %v593
        %v1109 = vunpack.c.h.b16 %v593
        %v1110 = vunpack.c.l.b16 %v594
        %v1111 = vunpack.c.h.b16 %v594
        %v1112 = vunpack.c.l.b16 %v595
        %v1113 = vunpack.c.h.b16 %v595
        %v1114 = vunpack.c.l.b16 %v596
        %v1115 = vunpack.c.h.b16 %v596
        %v1116 = vunpack.c.l.b16 %v597
        %v1117 = vunpack.c.h.b16 %v597
        %v1118 = vunpack.c.l.b16 %v598
        %v1119 = vunpack.c.h.b16 %v598
        %v1120 = vunpack.c.l.b16 %v599
        %v1121 = vunpack.c.h.b16 %v599
        %v1122 = vunpack.c.l.b16 %v600
        %v1123 = vunpack.c.h.b16 %v600
        %v1124 = vunpack.c.l.b16 %v601
        %v1125 = vunpack.c.h.b16 %v601
        %v1126 = vunpack.c.l.b16 %v602
        %v1127 = vunpack.c.h.b16 %v602
        %v1128 = vunpack.c.l.b16 %v603
        %v1129 = vunpack.c.h.b16 %v603
        %v1130 = vunpack.c.l.b16 %v604
        %v1131 = vunpack.c.h.b16 %v604
        %v1132 = vunpack.c.l.b16 %v605
        %v1133 = vunpack.c.h.b16 %v605
        %v1134 = vunpack.c.l.b16 %v606
        %v1135 = vunpack.c.h.b16 %v606
        %v1136 = vunpack.c.l.b16 %v607
        %v1137 = vunpack.c.h.b16 %v607
        %v1138 = vunpack.c.l.b16 %v608
        %v1139 = vunpack.c.h.b16 %v608
        %v1140 = vunpack.c.l.b16 %v609
        %v1141 = vunpack.c.h.b16 %v609
        %v1142 = vunpack.c.l.b16 %v610
        %v1143 = vunpack.c.h.b16 %v610
        %v1144 = vunpack.c.l.b16 %v611
        %v1145 = vunpack.c.h.b16 %v611
        %v1146 = vunpack.c.l.b16 %v612
        %v1147 = vunpack.c.h.b16 %v612
        %v1148 = vunpack.c.l.b16 %v613
        %v1149 = vunpack.c.h.b16 %v613
        %v1150 = vunpack.c.l.b16 %v614
        %v1151 = vunpack.c.h.b16 %v614
        %v1152 = vunpack.c.l.b16 %v615
        %v1153 = vunpack.c.h.b16 %v615
        %v1154 = vunpack.c.l.b16 %v616
        %v1155 = vunpack.c.h.b16 %v616
        %v1156 = vunpack.c.l.b16 %v617
        %v1157 = vunpack.c.h.b16 %v617
        %v1158 = vunpack.c.l.b16 %v618
        %v1159 = vunpack.c.h.b16 %v618
        %v1160 = vunpack.c.l.b16 %v619
        %v1161 = vunpack.c.h.b16 %v619
        %v1162 = vunpack.c.l.b16 %v620
        %v1163 = vunpack.c.h.b16 %v620
        %v1164 = vunpack.c.l.b16 %v621
        %v1165 = vunpack.c.h.b16 %v621
        %v1166 = vunpack.c.l.b16 %v622
        %v1167 = vunpack.c.h.b16 %v622
        %v1168 = vunpack.c.l.b16 %v623
        %v1169 = vunpack.c.h.b16 %v623
        %v1170 = vunpack.c.l.b16 %v624
        %v1171 = vunpack.c.h.b16 %v624
        %v1172 = vunpack.c.l.b16 %v625
        %v1173 = vunpack.c.h.b16 %v625
        %v1174 = vunpack.c.l.b16 %v626
        %v1175 = vunpack.c.h.b16 %v626
        %v1176 = vunpack.c.l.b16 %v627
        %v1177 = vunpack.c.h.b16 %v627
        %v1178 = vunpack.c.l.b16 %v628
        %v1179 = vunpack.c.h.b16 %v628
        %v1180 = vunpack.c.l.b16 %v629
        %v1181 = vunpack.c.h.b16 %v629
        %v1182 = vunpack.c.l.b16 %v630
        %v1183 = vunpack.c.h.b16 %v630
        %v1184 = vunpack.c.l.b16 %v631
        %v1185 = vunpack.c.h.b16 %v631
        %v1186 = vunpack.c.l.b16 %v632
        %v1187 = vunpack.c.h.b16 %v632
        %v1188 = vunpack.c.l.b16 %v633
        %v1189 = vunpack.c.h.b16 %v633
        %v1190 = vunpack.c.l.b16 %v634
        %v1191 = vunpack.c.h.b16 %v634
        %v1192 = vunpack.c.l.b16 %v635
        %v1193 = vunpack.c.h.b16 %v635
        %v1194 = vunpack.c.l.b16 %v636
        %v1195 = vunpack.c.h.b16 %v636
        %v1196 = vunpack.c.l.b16 %v637
        %v1197 = vunpack.c.h.b16 %v637
        %v1198 = vunpack.c.l.b16 %v638
        %v1199 = vunpack.c.h.b16 %v638
        %v1200 = vunpack.c.l.b16 %v639
        %v1201 = vunpack.c.h.b16 %v639
        %v1202 = vunpack.c.l.b16 %v640
        %v1203 = vunpack.c.h.b16 %v640
        %v1204 = vunpack.c.l.b16 %v641
        %v1205 = vunpack.c.h.b16 %v641
        %v1206 = vunpack.c.l.b16 %v642
        %v1207 = vunpack.c.h.b16 %v642
        %v1208 = vunpack.c.l.b16 %v643
        %v1209 = vunpack.c.h.b16 %v643
        %v1210 = vunpack.c.l.b16 %v644
        %v1211 = vunpack.c.h.b16 %v644
        %v1212 = vunpack.c.l.b16 %v645
        %v1213 = vunpack.c.h.b16 %v645
        %v1214 = vunpack.c.l.b16 %v646
        %v1215 = vunpack.c.h.b16 %v646
        %v1216 = vunpack.c.l.b16 %v647
        %v1217 = vunpack.c.h.b16 %v647
        %v1218 = vunpack.c.l.b16 %v648
        %v1219 = vunpack.c.h.b16 %v648
        %v1220 = vunpack.c.l.b16 %v649
        %v1221 = vunpack.c.h.b16 %v649
        %v1222 = vunpack.c.l.b16 %v650
        %v1223 = vunpack.c.h.b16 %v650
        %v1224 = vunpack.c.l.b16 %v651
        %v1225 = vunpack.c.h.b16 %v651
        %v1226 = vunpack.c.l.b16 %v652
        %v1227 = vunpack.c.h.b16 %v652
        %v1228 = vunpack.c.l.b16 %v653
        %v1229 = vunpack.c.h.b16 %v653
        %v1230 = vpack.c.b16 %v850, %v846
        %v1231 = vpack.c.b16 %v851, %v847
        %v1232 = vpack.c.b16 %v852, %v848
        %v1233 = vpack.c.b16 %v853, %v849
        %v1234 = vpack.c.b16 %v858, %v854
        %v1235 = vpack.c.b16 %v859, %v855
        %v1236 = vpack.c.b16 %v860, %v856
        %v1237 = vpack.c.b16 %v861, %v857
        %v1238 = vpack.c.b16 %v866, %v862
        %v1239 = vpack.c.b16 %v867, %v863
        %v1240 = vpack.c.b16 %v868, %v864
        %v1241 = vpack.c.b16 %v869, %v865
        %v1242 = vpack.c.b16 %v874, %v870
        %v1243 = vpack.c.b16 %v875, %v871
        %v1244 = vpack.c.b16 %v876, %v872
        %v1245 = vpack.c.b16 %v877, %v873
        %v1246 = vpack.c.b16 %v882, %v878
        %v1247 = vpack.c.b16 %v883, %v879
        %v1248 = vpack.c.b16 %v884, %v880
        %v1249 = vpack.c.b16 %v885, %v881
        %v1250 = vpack.c.b16 %v890, %v886
        %v1251 = vpack.c.b16 %v891, %v887
        %v1252 = vpack.c.b16 %v892, %v888
        %v1253 = vpack.c.b16 %v893, %v889
        %v1254 = vpack.c.b16 %v898, %v894
        %v1255 = vpack.c.b16 %v899, %v895
        %v1256 = vpack.c.b16 %v900, %v896
        %v1257 = vpack.c.b16 %v901, %v897
        %v1258 = vpack.c.b16 %v906, %v902
        %v1259 = vpack.c.b16 %v907, %v903
        %v1260 = vpack.c.b16 %v908, %v904
        %v1261 = vpack.c.b16 %v909, %v905
        %v1262 = vpack.c.b16 %v914, %v910
        %v1263 = vpack.c.b16 %v915, %v911
        %v1264 = vpack.c.b16 %v916, %v912
        %v1265 = vpack.c.b16 %v917, %v913
        %v1266 = vpack.c.b16 %v922, %v918
        %v1267 = vpack.c.b16 %v923, %v919
        %v1268 = vpack.c.b16 %v924, %v920
        %v1269 = vpack.c.b16 %v925, %v921
        %v1270 = vpack.c.b16 %v930, %v926
        %v1271 = vpack.c.b16 %v931, %v927
        %v1272 = vpack.c.b16 %v932, %v928
        %v1273 = vpack.c.b16 %v933, %v929
        %v1274 = vpack.c.b16 %v938, %v934
        %v1275 = vpack.c.b16 %v939, %v935
        %v1276 = vpack.c.b16 %v940, %v936
        %v1277 = vpack.c.b16 %v941, %v937
        %v1278 = vpack.c.b16 %v946, %v942
        %v1279 = vpack.c.b16 %v947, %v943
        %v1280 = vpack.c.b16 %v948, %v944
        %v1281 = vpack.c.b16 %v949, %v945
        %v1282 = vpack.c.b16 %v954, %v950
        %v1283 = vpack.c.b16 %v955, %v951
        %v1284 = vpack.c.b16 %v956, %v952
        %v1285 = vpack.c.b16 %v957, %v953
        %v1286 = vpack.c.b16 %v962, %v958
        %v1287 = vpack.c.b16 %v963, %v959
        %v1288 = vpack.c.b16 %v964, %v960
        %v1289 = vpack.c.b16 %v965, %v961
        %v1290 = vpack.c.b16 %v970, %v966
        %v1291 = vpack.c.b16 %v971, %v967
        %v1292 = vpack.c.b16 %v972, %v968
        %v1293 = vpack.c.b16 %v973, %v969
        %v1294 = vpack.c.b16 %v978, %v974
        %v1295 = vpack.c.b16 %v979, %v975
        %v1296 = vpack.c.b16 %v980, %v976
        %v1297 = vpack.c.b16 %v981, %v977
        %v1298 = vpack.c.b16 %v986, %v982
        %v1299 = vpack.c.b16 %v987, %v983
        %v1300 = vpack.c.b16 %v988, %v984
        %v1301 = vpack.c.b16 %v989, %v985
        %v1302 = vpack.c.b16 %v994, %v990
        %v1303 = vpack.c.b16 %v995, %v991
        %v1304 = vpack.c.b16 %v996, %v992
        %v1305 = vpack.c.b16 %v997, %v993
        %v1306 = vpack.c.b16 %v1002, %v998
        %v1307 = vpack.c.b16 %v1003, %v999
        %v1308 = vpack.c.b16 %v1004, %v1000
        %v1309 = vpack.c.b16 %v1005, %v1001
        %v1310 = vpack.c.b16 %v1010, %v1006
        %v1311 = vpack.c.b16 %v1011, %v1007
        %v1312 = vpack.c.b16 %v1012, %v1008
        %v1313 = vpack.c.b16 %v1013, %v1009
        %v1314 = vpack.c.b16 %v1018, %v1014
        %v1315 = vpack.c.b16 %v1019, %v1015
        %v1316 = vpack.c.b16 %v1020, %v1016
        %v1317 = vpack.c.b16 %v1021, %v1017
        %v1318 = vpack.c.b16 %v1026, %v1022
        %v1319 = vpack.c.b16 %v1027, %v1023
        %v1320 = vpack.c.b16 %v1028, %v1024
        %v1321 = vpack.c.b16 %v1029, %v1025
        %v1322 = vpack.c.b16 %v1034, %v1030
        %v1323 = vpack.c.b16 %v1035, %v1031
        %v1324 = vpack.c.b16 %v1036, %v1032
        %v1325 = vpack.c.b16 %v1037, %v1033
        %v1326 = vpack.c.b16 %v1042, %v1038
        %v1327 = vpack.c.b16 %v1043, %v1039
        %v1328 = vpack.c.b16 %v1044, %v1040
        %v1329 = vpack.c.b16 %v1045, %v1041
        %v1330 = vpack.c.b16 %v1050, %v1046
        %v1331 = vpack.c.b16 %v1051, %v1047
        %v1332 = vpack.c.b16 %v1052, %v1048
        %v1333 = vpack.c.b16 %v1053, %v1049
        %v1334 = vpack.c.b16 %v1058, %v1054
        %v1335 = vpack.c.b16 %v1059, %v1055
        %v1336 = vpack.c.b16 %v1060, %v1056
        %v1337 = vpack.c.b16 %v1061, %v1057
        %v1338 = vpack.c.b16 %v1066, %v1062
        %v1339 = vpack.c.b16 %v1067, %v1063
        %v1340 = vpack.c.b16 %v1068, %v1064
        %v1341 = vpack.c.b16 %v1069, %v1065
        %v1342 = vpack.c.b16 %v1074, %v1070
        %v1343 = vpack.c.b16 %v1075, %v1071
        %v1344 = vpack.c.b16 %v1076, %v1072
        %v1345 = vpack.c.b16 %v1077, %v1073
        %v1346 = vpack.c.b16 %v1082, %v1078
        %v1347 = vpack.c.b16 %v1083, %v1079
        %v1348 = vpack.c.b16 %v1084, %v1080
        %v1349 = vpack.c.b16 %v1085, %v1081
        %v1350 = vpack.c.b16 %v1090, %v1086
        %v1351 = vpack.c.b16 %v1091, %v1087
        %v1352 = vpack.c.b16 %v1092, %v1088
        %v1353 = vpack.c.b16 %v1093, %v1089
        %v1354 = vpack.c.b16 %v1098, %v1094
        %v1355 = vpack.c.b16 %v1099, %v1095
        %v1356 = vpack.c.b16 %v1100, %v1096
        %v1357 = vpack.c.b16 %v1101, %v1097
        %v1358 = vpack.c.b16 %v1106, %v1102
        %v1359 = vpack.c.b16 %v1107, %v1103
        %v1360 = vpack.c.b16 %v1108, %v1104
        %v1361 = vpack.c.b16 %v1109, %v1105
        %v1362 = vpack.c.b16 %v1114, %v1110
        %v1363 = vpack.c.b16 %v1115, %v1111
        %v1364 = vpack.c.b16 %v1116, %v1112
        %v1365 = vpack.c.b16 %v1117, %v1113
        %v1366 = vpack.c.b16 %v1122, %v1118
        %v1367 = vpack.c.b16 %v1123, %v1119
        %v1368 = vpack.c.b16 %v1124, %v1120
        %v1369 = vpack.c.b16 %v1125, %v1121
        %v1370 = vpack.c.b16 %v1130, %v1126
        %v1371 = vpack.c.b16 %v1131, %v1127
        %v1372 = vpack.c.b16 %v1132, %v1128
        %v1373 = vpack.c.b16 %v1133, %v1129
        %v1374 = vpack.c.b16 %v1138, %v1134
        %v1375 = vpack.c.b16 %v1139, %v1135
        %v1376 = vpack.c.b16 %v1140, %v1136
        %v1377 = vpack.c.b16 %v1141, %v1137
        %v1378 = vpack.c.b16 %v1146, %v1142
        %v1379 = vpack.c.b16 %v1147, %v1143
        %v1380 = vpack.c.b16 %v1148, %v1144
        %v1381 = vpack.c.b16 %v1149, %v1145
        %v1382 = vpack.c.b16 %v1154, %v1150
        %v1383 = vpack.c.b16 %v1155, %v1151
        %v1384 = vpack.c.b16 %v1156, %v1152
        %v1385 = vpack.c.b16 %v1157, %v1153
        %v1386 = vpack.c.b16 %v1162, %v1158
        %v1387 = vpack.c.b16 %v1163, %v1159
        %v1388 = vpack.c.b16 %v1164, %v1160
        %v1389 = vpack.c.b16 %v1165, %v1161
        %v1390 = vpack.c.b16 %v1170, %v1166
        %v1391 = vpack.c.b16 %v1171, %v1167
        %v1392 = vpack.c.b16 %v1172, %v1168
        %v1393 = vpack.c.b16 %v1173, %v1169
        %v1394 = vpack.c.b16 %v1178, %v1174
        %v1395 = vpack.c.b16 %v1179, %v1175
        %v1396 = vpack.c.b16 %v1180, %v1176
        %v1397 = vpack.c.b16 %v1181, %v1177
        %v1398 = vpack.c.b16 %v1186, %v1182
        %v1399 = vpack.c.b16 %v1187, %v1183
        %v1400 = vpack.c.b16 %v1188, %v1184
        %v1401 = vpack.c.b16 %v1189, %v1185
        %v1402 = vpack.c.b16 %v1194, %v1190
        %v1403 = vpack.c.b16 %v1195, %v1191
        %v1404 = vpack.c.b16 %v1196, %v1192
        %v1405 = vpack.c.b16 %v1197, %v1193
        %v1406 = vpack.c.b16 %v1202, %v1198
        %v1407 = vpack.c.b16 %v1203, %v1199
        %v1408 = vpack.c.b16 %v1204, %v1200
        %v1409 = vpack.c.b16 %v1205, %v1201
        %v1410 = vpack.c.b16 %v1210, %v1206
        %v1411 = vpack.c.b16 %v1211, %v1207
        %v1412 = vpack.c.b16 %v1212, %v1208
        %v1413 = vpack.c.b16 %v1213, %v1209
        %v1414 = vpack.c.b16 %v1218, %v1214
        %v1415 = vpack.c.b16 %v1219, %v1215
        %v1416 = vpack.c.b16 %v1220, %v1216
        %v1417 = vpack.c.b16 %v1221, %v1217
        %v1418 = vpack.c.b16 %v1226, %v1222
        %v1419 = vpack.c.b16 %v1227, %v1223
        %v1420 = vpack.c.b16 %v1228, %v1224
        %v1421 = vpack.c.b16 %v1229, %v1225
        %1614 = vmatprep.subr.bf16.mxu0 %v1231
        %1615 = vmatpush1.bf16.msra.mxu0 %v1230
        %1616 = vmatprep.subr.bf16.mxu0 %v1235
        %1617 = vmatpush1.bf16.msra.mxu0 %v1234
        %1618 = vmatprep.subr.bf16.mxu0 %v1239
        %1619 = vmatpush1.bf16.msra.mxu0 %v1238
        %1620 = vmatprep.subr.bf16.mxu0 %v1243
        %1621 = vmatpush1.bf16.msra.mxu0 %v1242
        %1622 = vmatprep.subr.bf16.mxu0 %v1247
        %1623 = vmatpush1.bf16.msra.mxu0 %v1246
        %1624 = vmatprep.subr.bf16.mxu0 %v1251
        %1625 = vmatpush1.bf16.msra.mxu0 %v1250
        %1626 = vmatprep.subr.bf16.mxu0 %v1255
        %1627 = vmatpush1.bf16.msra.mxu0 %v1254
        %1628 = vmatprep.subr.bf16.mxu0 %v1259
        %1629 = vmatpush1.bf16.msra.mxu0 %v1258
        %1630 = vmatprep.subr.bf16.mxu0 %v1263
        %1631 = vmatpush1.bf16.msra.mxu0 %v1262
        %1632 = vmatprep.subr.bf16.mxu0 %v1267
        %1633 = vmatpush1.bf16.msra.mxu0 %v1266
        %1634 = vmatprep.subr.bf16.mxu0 %v1271
        %1635 = vmatpush1.bf16.msra.mxu0 %v1270
        %1636 = vmatprep.subr.bf16.mxu0 %v1275
        %1637 = vmatpush1.bf16.msra.mxu0 %v1274
        %1638 = vmatprep.subr.bf16.mxu0 %v1279
        %1639 = vmatpush1.bf16.msra.mxu0 %v1278
        %1640 = vmatprep.subr.bf16.mxu0 %v1283
        %1641 = vmatpush1.bf16.msra.mxu0 %v1282
        %1642 = vmatprep.subr.bf16.mxu0 %v1287
        %1643 = vmatpush1.bf16.msra.mxu0 %v1286
        %1644 = vmatprep.subr.bf16.mxu0 %v1291
        %1645 = vmatpush1.bf16.msra.mxu0 %v1290
        %1646 = vmatprep.mubr.bf16.mxu0 %v457
        %1647 = vmatmul.mubr.bf16.gmra.mrb[0].mxu0 %v456
        %v1648 = vpop.f32.mrb[0].mxu0
        %v1649 = vadd.f32 0.0, %v1648
        %v1650 = vpop.f32.mrb[0].mxu0
        %v1651 = vadd.f32 0.0, %v1650
        %v1652 = vpop.f32.mrb[0].mxu0
        %v1653 = vpop.f32.mrb[0].mxu0
        %1654 = vdwg.mxu0
        %1655 = vmatprep.subr.bf16.mxu0 %v1295
        %1656 = vmatpush1.bf16.msra.mxu0 %v1294
        %1657 = vmatprep.subr.bf16.mxu0 %v1299
        %1658 = vmatpush1.bf16.msra.mxu0 %v1298
        %1659 = vmatprep.subr.bf16.mxu0 %v1303
        %1660 = vmatpush1.bf16.msra.mxu0 %v1302
        %1661 = vmatprep.subr.bf16.mxu0 %v1307
        %1662 = vmatpush1.bf16.msra.mxu0 %v1306
        %1663 = vmatprep.subr.bf16.mxu0 %v1311
        %1664 = vmatpush1.bf16.msra.mxu0 %v1310
        %1665 = vmatprep.subr.bf16.mxu0 %v1315
        %1666 = vmatpush1.bf16.msra.mxu0 %v1314
        %1667 = vmatprep.subr.bf16.mxu0 %v1319
        %1668 = vmatpush1.bf16.msra.mxu0 %v1318
        %1669 = vmatprep.subr.bf16.mxu0 %v1323
        %1670 = vmatpush1.bf16.msra.mxu0 %v1322
        %1671 = vmatprep.subr.bf16.mxu0 %v1327
        %1672 = vmatpush1.bf16.msra.mxu0 %v1326
        %1673 = vmatprep.subr.bf16.mxu0 %v1331
        %1674 = vmatpush1.bf16.msra.mxu0 %v1330
        %1675 = vmatprep.subr.bf16.mxu0 %v1335
        %1676 = vmatpush1.bf16.msra.mxu0 %v1334
        %1677 = vmatprep.subr.bf16.mxu0 %v1339
        %1678 = vmatpush1.bf16.msra.mxu0 %v1338
        %1679 = vmatprep.subr.bf16.mxu0 %v1343
        %1680 = vmatpush1.bf16.msra.mxu0 %v1342
        %1681 = vmatprep.subr.bf16.mxu0 %v1347
        %1682 = vmatpush1.bf16.msra.mxu0 %v1346
        %1683 = vmatprep.subr.bf16.mxu0 %v1351
        %1684 = vmatpush1.bf16.msra.mxu0 %v1350
        %1685 = vmatprep.subr.bf16.mxu0 %v1355
        %1686 = vmatpush1.bf16.msra.mxu0 %v1354
        %1687 = vmatprep.mubr.bf16.mxu0 %v459
        %1688 = vmatmul.mubr.bf16.gmra.mrb[0].mxu0 %v458
        %v1689 = vpop.f32.mrb[0].mxu0
        %v1690 = vadd.f32 %v1649, %v1689
        %v1691 = vpop.f32.mrb[0].mxu0
        %v1692 = vadd.f32 %v1651, %v1691
        %v1693 = vpop.f32.mrb[0].mxu0
        %v1694 = vpop.f32.mrb[0].mxu0
        %1695 = vdwg.mxu0
        %1696 = vmatprep.subr.bf16.mxu0 %v1359
        %1697 = vmatpush1.bf16.msra.mxu0 %v1358
        %1698 = vmatprep.subr.bf16.mxu0 %v1363
        %1699 = vmatpush1.bf16.msra.mxu0 %v1362
        %1700 = vmatprep.subr.bf16.mxu0 %v1367
        %1701 = vmatpush1.bf16.msra.mxu0 %v1366
        %1702 = vmatprep.subr.bf16.mxu0 %v1371
        %1703 = vmatpush1.bf16.msra.mxu0 %v1370
        %1704 = vmatprep.subr.bf16.mxu0 %v1375
        %1705 = vmatpush1.bf16.msra.mxu0 %v1374
        %1706 = vmatprep.subr.bf16.mxu0 %v1379
        %1707 = vmatpush1.bf16.msra.mxu0 %v1378
        %1708 = vmatprep.subr.bf16.mxu0 %v1383
        %1709 = vmatpush1.bf16.msra.mxu0 %v1382
        %1710 = vmatprep.subr.bf16.mxu0 %v1387
        %1711 = vmatpush1.bf16.msra.mxu0 %v1386
        %1712 = vmatprep.subr.bf16.mxu0 %v1391
        %1713 = vmatpush1.bf16.msra.mxu0 %v1390
        %1714 = vmatprep.subr.bf16.mxu0 %v1395
        %1715 = vmatpush1.bf16.msra.mxu0 %v1394
        %1716 = vmatprep.subr.bf16.mxu0 %v1399
        %1717 = vmatpush1.bf16.msra.mxu0 %v1398
        %1718 = vmatprep.subr.bf16.mxu0 %v1403
        %1719 = vmatpush1.bf16.msra.mxu0 %v1402
        %1720 = vmatprep.subr.bf16.mxu0 %v1407
        %1721 = vmatpush1.bf16.msra.mxu0 %v1406
        %1722 = vmatprep.subr.bf16.mxu0 %v1411
        %1723 = vmatpush1.bf16.msra.mxu0 %v1410
        %1724 = vmatprep.subr.bf16.mxu0 %v1415
        %1725 = vmatpush1.bf16.msra.mxu0 %v1414
        %1726 = vmatprep.subr.bf16.mxu0 %v1419
        %1727 = vmatpush1.bf16.msra.mxu0 %v1418
        %1728 = vmatprep.mubr.bf16.mxu0 %v461
        %1729 = vmatmul.mubr.bf16.gmra.mrb[0].mxu0 %v460
        %v1730 = vpop.f32.mrb[0].mxu0
        %v1731 = vadd.f32 %v1690, %v1730
        %v1732 = vpop.f32.mrb[0].mxu0
        %v1733 = vadd.f32 %v1692, %v1732
        %v1734 = vpop.f32.mrb[0].mxu0
        %v1735 = vpop.f32.mrb[0].mxu0
        %1736 = vdwg.mxu0
        %1737 = vmatprep.subr.bf16.mxu0 %v1233
        %1738 = vmatpush1.bf16.msra.mxu0 %v1232
        %1739 = vmatprep.subr.bf16.mxu0 %v1237
        %1740 = vmatpush1.bf16.msra.mxu0 %v1236
        %1741 = vmatprep.subr.bf16.mxu0 %v1241
        %1742 = vmatpush1.bf16.msra.mxu0 %v1240
        %1743 = vmatprep.subr.bf16.mxu0 %v1245
        %1744 = vmatpush1.bf16.msra.mxu0 %v1244
        %1745 = vmatprep.subr.bf16.mxu0 %v1249
        %1746 = vmatpush1.bf16.msra.mxu0 %v1248
        %1747 = vmatprep.subr.bf16.mxu0 %v1253
        %1748 = vmatpush1.bf16.msra.mxu0 %v1252
        %1749 = vmatprep.subr.bf16.mxu0 %v1257
        %1750 = vmatpush1.bf16.msra.mxu0 %v1256
        %1751 = vmatprep.subr.bf16.mxu0 %v1261
        %1752 = vmatpush1.bf16.msra.mxu0 %v1260
        %1753 = vmatprep.subr.bf16.mxu0 %v1265
        %1754 = vmatpush1.bf16.msra.mxu0 %v1264
        %1755 = vmatprep.subr.bf16.mxu0 %v1269
        %1756 = vmatpush1.bf16.msra.mxu0 %v1268
        %1757 = vmatprep.subr.bf16.mxu0 %v1273
        %1758 = vmatpush1.bf16.msra.mxu0 %v1272
        %1759 = vmatprep.subr.bf16.mxu0 %v1277
        %1760 = vmatpush1.bf16.msra.mxu0 %v1276
        %1761 = vmatprep.subr.bf16.mxu0 %v1281
        %1762 = vmatpush1.bf16.msra.mxu0 %v1280
        %1763 = vmatprep.subr.bf16.mxu0 %v1285
        %1764 = vmatpush1.bf16.msra.mxu0 %v1284
        %1765 = vmatprep.subr.bf16.mxu0 %v1289
        %1766 = vmatpush1.bf16.msra.mxu0 %v1288
        %1767 = vmatprep.subr.bf16.mxu0 %v1293
        %1768 = vmatpush1.bf16.msra.mxu0 %v1292
        %1769 = vmatprep.mubr.bf16.mxu0 %v457
        %1770 = vmatmul.mubr.bf16.gmra.mrb[0].mxu0 %v456
        %v1771 = vpop.f32.mrb[0].mxu0
        %v1772 = vadd.f32 0.0, %v1771
        %v1773 = vpop.f32.mrb[0].mxu0
        %v1774 = vadd.f32 0.0, %v1773
        %v1775 = vpop.f32.mrb[0].mxu0
        %v1776 = vpop.f32.mrb[0].mxu0
        %1777 = vdwg.mxu0
        %1778 = vmatprep.subr.bf16.mxu0 %v1297
        %1779 = vmatpush1.bf16.msra.mxu0 %v1296
        %1780 = vmatprep.subr.bf16.mxu0 %v1301
        %1781 = vmatpush1.bf16.msra.mxu0 %v1300
        %1782 = vmatprep.subr.bf16.mxu0 %v1305
        %1783 = vmatpush1.bf16.msra.mxu0 %v1304
        %1784 = vmatprep.subr.bf16.mxu0 %v1309
        %1785 = vmatpush1.bf16.msra.mxu0 %v1308
        %1786 = vmatprep.subr.bf16.mxu0 %v1313
        %1787 = vmatpush1.bf16.msra.mxu0 %v1312
        %1788 = vmatprep.subr.bf16.mxu0 %v1317
        %1789 = vmatpush1.bf16.msra.mxu0 %v1316
        %1790 = vmatprep.subr.bf16.mxu0 %v1321
        %1791 = vmatpush1.bf16.msra.mxu0 %v1320
        %1792 = vmatprep.subr.bf16.mxu0 %v1325
        %1793 = vmatpush1.bf16.msra.mxu0 %v1324
        %1794 = vmatprep.subr.bf16.mxu0 %v1329
        %1795 = vmatpush1.bf16.msra.mxu0 %v1328
        %1796 = vmatprep.subr.bf16.mxu0 %v1333
        %1797 = vmatpush1.bf16.msra.mxu0 %v1332
        %1798 = vmatprep.subr.bf16.mxu0 %v1337
        %1799 = vmatpush1.bf16.msra.mxu0 %v1336
        %1800 = vmatprep.subr.bf16.mxu0 %v1341
        %1801 = vmatpush1.bf16.msra.mxu0 %v1340
        %1802 = vmatprep.subr.bf16.mxu0 %v1345
        %1803 = vmatpush1.bf16.msra.mxu0 %v1344
        %1804 = vmatprep.subr.bf16.mxu0 %v1349
        %1805 = vmatpush1.bf16.msra.mxu0 %v1348
        %1806 = vmatprep.subr.bf16.mxu0 %v1353
        %1807 = vmatpush1.bf16.msra.mxu0 %v1352
        %1808 = vmatprep.subr.bf16.mxu0 %v1357
        %1809 = vmatpush1.bf16.msra.mxu0 %v1356
        %1810 = vmatprep.mubr.bf16.mxu0 %v459
        %1811 = vmatmul.mubr.bf16.gmra.mrb[0].mxu0 %v458
        %v1812 = vpop.f32.mrb[0].mxu0
        %v1813 = vadd.f32 %v1772, %v1812
        %v1814 = vpop.f32.mrb[0].mxu0
        %v1815 = vadd.f32 %v1774, %v1814
        %v1816 = vpop.f32.mrb[0].mxu0
        %v1817 = vpop.f32.mrb[0].mxu0
        %1818 = vdwg.mxu0
        %1819 = vmatprep.subr.bf16.mxu0 %v1361
        %1820 = vmatpush1.bf16.msra.mxu0 %v1360
        %1821 = vmatprep.subr.bf16.mxu0 %v1365
        %1822 = vmatpush1.bf16.msra.mxu0 %v1364
        %1823 = vmatprep.subr.bf16.mxu0 %v1369
        %1824 = vmatpush1.bf16.msra.mxu0 %v1368
        %1825 = vmatprep.subr.bf16.mxu0 %v1373
        %1826 = vmatpush1.bf16.msra.mxu0 %v1372
        %1827 = vmatprep.subr.bf16.mxu0 %v1377
        %1828 = vmatpush1.bf16.msra.mxu0 %v1376
        %1829 = vmatprep.subr.bf16.mxu0 %v1381
        %1830 = vmatpush1.bf16.msra.mxu0 %v1380
        %1831 = vmatprep.subr.bf16.mxu0 %v1385
        %1832 = vmatpush1.bf16.msra.mxu0 %v1384
        %1833 = vmatprep.subr.bf16.mxu0 %v1389
        %1834 = vmatpush1.bf16.msra.mxu0 %v1388
        %1835 = vmatprep.subr.bf16.mxu0 %v1393
        %1836 = vmatpush1.bf16.msra.mxu0 %v1392
        %1837 = vmatprep.subr.bf16.mxu0 %v1397
        %1838 = vmatpush1.bf16.msra.mxu0 %v1396
        %1839 = vmatprep.subr.bf16.mxu0 %v1401
        %1840 = vmatpush1.bf16.msra.mxu0 %v1400
        %1841 = vmatprep.subr.bf16.mxu0 %v1405
        %1842 = vmatpush1.bf16.msra.mxu0 %v1404
        %1843 = vmatprep.subr.bf16.mxu0 %v1409
        %1844 = vmatpush1.bf16.msra.mxu0 %v1408
        %1845 = vmatprep.subr.bf16.mxu0 %v1413
        %1846 = vmatpush1.bf16.msra.mxu0 %v1412
        %1847 = vmatprep.subr.bf16.mxu0 %v1417
        %1848 = vmatpush1.bf16.msra.mxu0 %v1416
        %1849 = vmatprep.subr.bf16.mxu0 %v1421
        %1850 = vmatpush1.bf16.msra.mxu0 %v1420
        %1851 = vmatprep.mubr.bf16.mxu0 %v461
        %1852 = vmatmul.mubr.bf16.gmra.mrb[0].mxu0 %v460
        %v1853 = vpop.f32.mrb[0].mxu0
        %v1854 = vadd.f32 %v1813, %v1853
        %v1855 = vpop.f32.mrb[0].mxu0
        %v1856 = vadd.f32 %v1815, %v1855
        %v1857 = vpop.f32.mrb[0].mxu0
        %v1858 = vpop.f32.mrb[0].mxu0
        %1859 = vdwg.mxu0
        %v1864 = vcombine.low %v1731, %v1733
        %v1865 = vcombine.low %v1854, %v1856
        %v1867 = vunpack.c.l.s4 1983009808
        %v1868 = vunpack.c.0.s8 %v1867
        %v1869 = vlaneseq
        %v1870 = vshrl.u32 %v1869, 7
        %v1871 = vsub.s32 %v1868, %v1870
        %v1872 = vrot.slane %v1864, %v1871
        %v1874 = vunpack.c.l.s4 1983009808
        %v1875 = vunpack.c.0.s8 %v1874
        %v1876 = vlaneseq
        %v1877 = vshrl.u32 %v1876, 7
        %v1878 = vsub.s32 %v1875, %v1877
        %v1879 = vrot.slane %v1865, %v1878
        %v1880 = vcombine.low %v1872, %v1879
        %v1882 = vadd.f32 %v420, %v1880
        %1883 = vst [vmem:[#allocation2] sm:$0xff] %v1882
        %p1884 = scmp.eq.s32.totalorder %s28, 1
        // Predicated region
        $region77: #{tpu_custom_call.1} parent=47 // pred_check
          %p1885 = pneg %p1884
        $region78: #{tpu_custom_call.1} parent=47 // pred_check_branch
          %1887 = sbr.rel (%p1885) target = $region80
        $region79: #{tpu_custom_call.1} parent=47 // pred_region
          %v1888 = vld [vmem:[#allocation2] sm:$0xff]
          %v1889 = vmax.f32 %v1888, 0.0
          %v1891 = vcombine.high %v1889, %v1889
          %v1893 = vunpack.c.l.s4 1983009808
          %v1894 = vunpack.c.0.s8 %v1893
          %v1895 = vlaneseq
          %v1896 = vshrl.u32 %v1895, 7
          %v1897 = vsub.s32 %v1894, %v1896
          %v1898 = vrot.slane %v1889, %v1897
          %v1900 = vunpack.c.l.s4 1983009808
          %v1901 = vunpack.c.0.s8 %v1900
          %v1902 = vlaneseq
          %v1903 = vshrl.u32 %v1902, 7
          %v1904 = vsub.s32 %v1901, %v1903
          %v1905 = vrot.slane %v1891, %v1904
          %v1906 = vcombine.high %v1898, %v1898
          %v1907 = vcombine.high %v1905, %v1905
          %v1912 = vpack.c.bf16 %v1898, %v1898
          %v1913 = vpack.c.bf16 %v1906, %v1906
          %v1914 = vpack.c.bf16 %v1905, %v1905
          %v1915 = vpack.c.bf16 %v1907, %v1907
          %v1916 = vld [vmem:[#allocation9] sm:$0xff]
          %v1917 = vld [vmem:[#allocation9 + $0x8] sm:$0xff]
          %v1918 = vld [vmem:[#allocation9 + $0x10] sm:$0xff]
          %v1919 = vld [vmem:[#allocation9 + $0x18] sm:$0xff]
          %v1920 = vld [vmem:[#allocation9 + $0x20] sm:$0xff]
          %v1921 = vld [vmem:[#allocation9 + $0x28] sm:$0xff]
          %v1922 = vld [vmem:[#allocation9 + $0x30] sm:$0xff]
          %v1923 = vld [vmem:[#allocation9 + $0x38] sm:$0xff]
          %v1924 = vld [vmem:[#allocation9 + $0x40] sm:$0xff]
          %v1925 = vld [vmem:[#allocation9 + $0x48] sm:$0xff]
          %v1926 = vld [vmem:[#allocation9 + $0x50] sm:$0xff]
          %v1927 = vld [vmem:[#allocation9 + $0x58] sm:$0xff]
          %v1928 = vld [vmem:[#allocation9 + $0x60] sm:$0xff]
          %v1929 = vld [vmem:[#allocation9 + $0x68] sm:$0xff]
          %v1930 = vld [vmem:[#allocation9 + $0x70] sm:$0xff]
          %v1931 = vld [vmem:[#allocation9 + $0x78] sm:$0xff]
          %v1932 = vld [vmem:[#allocation9 + $0x80] sm:$0xff]
          %v1933 = vld [vmem:[#allocation9 + $0x88] sm:$0xff]
          %v1934 = vld [vmem:[#allocation9 + $0x90] sm:$0xff]
          %v1935 = vld [vmem:[#allocation9 + $0x98] sm:$0xff]
          %v1936 = vld [vmem:[#allocation9 + $0xa0] sm:$0xff]
          %v1937 = vld [vmem:[#allocation9 + $0xa8] sm:$0xff]
          %v1938 = vld [vmem:[#allocation9 + $0xb0] sm:$0xff]
          %v1939 = vld [vmem:[#allocation9 + $0xb8] sm:$0xff]
          %v1940 = vld [vmem:[#allocation9 + $0xc0] sm:$0xff]
          %v1941 = vld [vmem:[#allocation9 + $0xc8] sm:$0xff]
          %v1942 = vld [vmem:[#allocation9 + $0xd0] sm:$0xff]
          %v1943 = vld [vmem:[#allocation9 + $0xd8] sm:$0xff]
          %v1944 = vld [vmem:[#allocation9 + $0xe0] sm:$0xff]
          %v1945 = vld [vmem:[#allocation9 + $0xe8] sm:$0xff]
          %v1946 = vld [vmem:[#allocation9 + $0xf0] sm:$0xff]
          %v1947 = vld [vmem:[#allocation9 + $0xf8] sm:$0xff]
          %v1948 = vld [vmem:[#allocation9 + $0x100] sm:$0xff]
          %v1949 = vld [vmem:[#allocation9 + $0x108] sm:$0xff]
          %v1950 = vld [vmem:[#allocation9 + $0x110] sm:$0xff]
          %v1951 = vld [vmem:[#allocation9 + $0x118] sm:$0xff]
          %v1952 = vld [vmem:[#allocation9 + $0x120] sm:$0xff]
          %v1953 = vld [vmem:[#allocation9 + $0x128] sm:$0xff]
          %v1954 = vld [vmem:[#allocation9 + $0x130] sm:$0xff]
          %v1955 = vld [vmem:[#allocation9 + $0x138] sm:$0xff]
          %v1956 = vld [vmem:[#allocation9 + $0x140] sm:$0xff]
          %v1957 = vld [vmem:[#allocation9 + $0x148] sm:$0xff]
          %v1958 = vld [vmem:[#allocation9 + $0x150] sm:$0xff]
          %v1959 = vld [vmem:[#allocation9 + $0x158] sm:$0xff]
          %v1960 = vld [vmem:[#allocation9 + $0x160] sm:$0xff]
          %v1961 = vld [vmem:[#allocation9 + $0x168] sm:$0xff]
          %v1962 = vld [vmem:[#allocation9 + $0x170] sm:$0xff]
          %v1963 = vld [vmem:[#allocation9 + $0x178] sm:$0xff]
          %v1964 = vld [vmem:[#allocation9 + $0x180] sm:$0xff]
          %v1965 = vld [vmem:[#allocation9 + $0x188] sm:$0xff]
          %v1966 = vld [vmem:[#allocation9 + $0x190] sm:$0xff]
          %v1967 = vld [vmem:[#allocation9 + $0x198] sm:$0xff]
          %v1968 = vld [vmem:[#allocation9 + $0x1a0] sm:$0xff]
          %v1969 = vld [vmem:[#allocation9 + $0x1a8] sm:$0xff]
          %v1970 = vld [vmem:[#allocation9 + $0x1b0] sm:$0xff]
          %v1971 = vld [vmem:[#allocation9 + $0x1b8] sm:$0xff]
          %v1972 = vld [vmem:[#allocation9 + $0x1c0] sm:$0xff]
          %v1973 = vld [vmem:[#allocation9 + $0x1c8] sm:$0xff]
          %v1974 = vld [vmem:[#allocation9 + $0x1d0] sm:$0xff]
          %v1975 = vld [vmem:[#allocation9 + $0x1d8] sm:$0xff]
          %v1976 = vld [vmem:[#allocation9 + $0x1e0] sm:$0xff]
          %v1977 = vld [vmem:[#allocation9 + $0x1e8] sm:$0xff]
          %v1978 = vld [vmem:[#allocation9 + $0x1f0] sm:$0xff]
          %v1979 = vld [vmem:[#allocation9 + $0x1f8] sm:$0xff]
          %v1980 = vld [vmem:[#allocation11] sm:$0x3]
          %v1982 = vlaneseq
          %v1983 = vshrl.u32 %v1982, 7
          %v1984 = vsub.s32 0, %v1983
          %v1985 = vrot.slane %v1980, %v1984
          %v1986 = vlaneseq
          %v1987 = vshrl.u32 %v1986, 7
          %v1988 = vsub.s32 1, %v1987
          %v1989 = vrot.slane %v1980, %v1988
          %v2056 = vunpack.c.l.b16 %v1916
          %v2057 = vunpack.c.h.b16 %v1916
          %v2058 = vunpack.c.l.b16 %v1917
          %v2059 = vunpack.c.h.b16 %v1917
          %v2060 = vunpack.c.l.b16 %v1918
          %v2061 = vunpack.c.h.b16 %v1918
          %v2062 = vunpack.c.l.b16 %v1919
          %v2063 = vunpack.c.h.b16 %v1919
          %v2064 = vunpack.c.l.b16 %v1920
          %v2065 = vunpack.c.h.b16 %v1920
          %v2066 = vunpack.c.l.b16 %v1921
          %v2067 = vunpack.c.h.b16 %v1921
          %v2068 = vunpack.c.l.b16 %v1922
          %v2069 = vunpack.c.h.b16 %v1922
          %v2070 = vunpack.c.l.b16 %v1923
          %v2071 = vunpack.c.h.b16 %v1923
          %v2072 = vunpack.c.l.b16 %v1924
          %v2073 = vunpack.c.h.b16 %v1924
          %v2074 = vunpack.c.l.b16 %v1925
          %v2075 = vunpack.c.h.b16 %v1925
          %v2076 = vunpack.c.l.b16 %v1926
          %v2077 = vunpack.c.h.b16 %v1926
          %v2078 = vunpack.c.l.b16 %v1927
          %v2079 = vunpack.c.h.b16 %v1927
          %v2080 = vunpack.c.l.b16 %v1928
          %v2081 = vunpack.c.h.b16 %v1928
          %v2082 = vunpack.c.l.b16 %v1929
          %v2083 = vunpack.c.h.b16 %v1929
          %v2084 = vunpack.c.l.b16 %v1930
          %v2085 = vunpack.c.h.b16 %v1930
          %v2086 = vunpack.c.l.b16 %v1931
          %v2087 = vunpack.c.h.b16 %v1931
          %v2088 = vunpack.c.l.b16 %v1932
          %v2089 = vunpack.c.h.b16 %v1932
          %v2090 = vunpack.c.l.b16 %v1933
          %v2091 = vunpack.c.h.b16 %v1933
          %v2092 = vunpack.c.l.b16 %v1934
          %v2093 = vunpack.c.h.b16 %v1934
          %v2094 = vunpack.c.l.b16 %v1935
          %v2095 = vunpack.c.h.b16 %v1935
          %v2096 = vunpack.c.l.b16 %v1936
          %v2097 = vunpack.c.h.b16 %v1936
          %v2098 = vunpack.c.l.b16 %v1937
          %v2099 = vunpack.c.h.b16 %v1937
          %v2100 = vunpack.c.l.b16 %v1938
          %v2101 = vunpack.c.h.b16 %v1938
          %v2102 = vunpack.c.l.b16 %v1939
          %v2103 = vunpack.c.h.b16 %v1939
          %v2104 = vunpack.c.l.b16 %v1940
          %v2105 = vunpack.c.h.b16 %v1940
          %v2106 = vunpack.c.l.b16 %v1941
          %v2107 = vunpack.c.h.b16 %v1941
          %v2108 = vunpack.c.l.b16 %v1942
          %v2109 = vunpack.c.h.b16 %v1942
          %v2110 = vunpack.c.l.b16 %v1943
          %v2111 = vunpack.c.h.b16 %v1943
          %v2112 = vunpack.c.l.b16 %v1944
          %v2113 = vunpack.c.h.b16 %v1944
          %v2114 = vunpack.c.l.b16 %v1945
          %v2115 = vunpack.c.h.b16 %v1945
          %v2116 = vunpack.c.l.b16 %v1946
          %v2117 = vunpack.c.h.b16 %v1946
          %v2118 = vunpack.c.l.b16 %v1947
          %v2119 = vunpack.c.h.b16 %v1947
          %v2120 = vunpack.c.l.b16 %v1948
          %v2121 = vunpack.c.h.b16 %v1948
          %v2122 = vunpack.c.l.b16 %v1949
          %v2123 = vunpack.c.h.b16 %v1949
          %v2124 = vunpack.c.l.b16 %v1950
          %v2125 = vunpack.c.h.b16 %v1950
          %v2126 = vunpack.c.l.b16 %v1951
          %v2127 = vunpack.c.h.b16 %v1951
          %v2128 = vunpack.c.l.b16 %v1952
          %v2129 = vunpack.c.h.b16 %v1952
          %v2130 = vunpack.c.l.b16 %v1953
          %v2131 = vunpack.c.h.b16 %v1953
          %v2132 = vunpack.c.l.b16 %v1954
          %v2133 = vunpack.c.h.b16 %v1954
          %v2134 = vunpack.c.l.b16 %v1955
          %v2135 = vunpack.c.h.b16 %v1955
          %v2136 = vunpack.c.l.b16 %v1956
          %v2137 = vunpack.c.h.b16 %v1956
          %v2138 = vunpack.c.l.b16 %v1957
          %v2139 = vunpack.c.h.b16 %v1957
          %v2140 = vunpack.c.l.b16 %v1958
          %v2141 = vunpack.c.h.b16 %v1958
          %v2142 = vunpack.c.l.b16 %v1959
          %v2143 = vunpack.c.h.b16 %v1959
          %v2144 = vunpack.c.l.b16 %v1960
          %v2145 = vunpack.c.h.b16 %v1960
          %v2146 = vunpack.c.l.b16 %v1961
          %v2147 = vunpack.c.h.b16 %v1961
          %v2148 = vunpack.c.l.b16 %v1962
          %v2149 = vunpack.c.h.b16 %v1962
          %v2150 = vunpack.c.l.b16 %v1963
          %v2151 = vunpack.c.h.b16 %v1963
          %v2152 = vunpack.c.l.b16 %v1964
          %v2153 = vunpack.c.h.b16 %v1964
          %v2154 = vunpack.c.l.b16 %v1965
          %v2155 = vunpack.c.h.b16 %v1965
          %v2156 = vunpack.c.l.b16 %v1966
          %v2157 = vunpack.c.h.b16 %v1966
          %v2158 = vunpack.c.l.b16 %v1967
          %v2159 = vunpack.c.h.b16 %v1967
          %v2160 = vunpack.c.l.b16 %v1968
          %v2161 = vunpack.c.h.b16 %v1968
          %v2162 = vunpack.c.l.b16 %v1969
          %v2163 = vunpack.c.h.b16 %v1969
          %v2164 = vunpack.c.l.b16 %v1970
          %v2165 = vunpack.c.h.b16 %v1970
          %v2166 = vunpack.c.l.b16 %v1971
          %v2167 = vunpack.c.h.b16 %v1971
          %v2168 = vunpack.c.l.b16 %v1972
          %v2169 = vunpack.c.h.b16 %v1972
          %v2170 = vunpack.c.l.b16 %v1973
          %v2171 = vunpack.c.h.b16 %v1973
          %v2172 = vunpack.c.l.b16 %v1974
          %v2173 = vunpack.c.h.b16 %v1974
          %v2174 = vunpack.c.l.b16 %v1975
          %v2175 = vunpack.c.h.b16 %v1975
          %v2176 = vunpack.c.l.b16 %v1976
          %v2177 = vunpack.c.h.b16 %v1976
          %v2178 = vunpack.c.l.b16 %v1977
          %v2179 = vunpack.c.h.b16 %v1977
          %v2180 = vunpack.c.l.b16 %v1978
          %v2181 = vunpack.c.h.b16 %v1978
          %v2182 = vunpack.c.l.b16 %v1979
          %v2183 = vunpack.c.h.b16 %v1979
          %v2184 = vpack.c.b16 %v2058, %v2056
          %v2185 = vpack.c.b16 %v2059, %v2057
          %v2186 = vpack.c.b16 %v2062, %v2060
          %v2187 = vpack.c.b16 %v2063, %v2061
          %v2188 = vpack.c.b16 %v2066, %v2064
          %v2189 = vpack.c.b16 %v2067, %v2065
          %v2190 = vpack.c.b16 %v2070, %v2068
          %v2191 = vpack.c.b16 %v2071, %v2069
          %v2192 = vpack.c.b16 %v2074, %v2072
          %v2193 = vpack.c.b16 %v2075, %v2073
          %v2194 = vpack.c.b16 %v2078, %v2076
          %v2195 = vpack.c.b16 %v2079, %v2077
          %v2196 = vpack.c.b16 %v2082, %v2080
          %v2197 = vpack.c.b16 %v2083, %v2081
          %v2198 = vpack.c.b16 %v2086, %v2084
          %v2199 = vpack.c.b16 %v2087, %v2085
          %v2200 = vpack.c.b16 %v2090, %v2088
          %v2201 = vpack.c.b16 %v2091, %v2089
          %v2202 = vpack.c.b16 %v2094, %v2092
          %v2203 = vpack.c.b16 %v2095, %v2093
          %v2204 = vpack.c.b16 %v2098, %v2096
          %v2205 = vpack.c.b16 %v2099, %v2097
          %v2206 = vpack.c.b16 %v2102, %v2100
          %v2207 = vpack.c.b16 %v2103, %v2101
          %v2208 = vpack.c.b16 %v2106, %v2104
          %v2209 = vpack.c.b16 %v2107, %v2105
          %v2210 = vpack.c.b16 %v2110, %v2108
          %v2211 = vpack.c.b16 %v2111, %v2109
          %v2212 = vpack.c.b16 %v2114, %v2112
          %v2213 = vpack.c.b16 %v2115, %v2113
          %v2214 = vpack.c.b16 %v2118, %v2116
          %v2215 = vpack.c.b16 %v2119, %v2117
          %v2216 = vpack.c.b16 %v2122, %v2120
          %v2217 = vpack.c.b16 %v2123, %v2121
          %v2218 = vpack.c.b16 %v2126, %v2124
          %v2219 = vpack.c.b16 %v2127, %v2125
          %v2220 = vpack.c.b16 %v2130, %v2128
          %v2221 = vpack.c.b16 %v2131, %v2129
          %v2222 = vpack.c.b16 %v2134, %v2132
          %v2223 = vpack.c.b16 %v2135, %v2133
          %v2224 = vpack.c.b16 %v2138, %v2136
          %v2225 = vpack.c.b16 %v2139, %v2137
          %v2226 = vpack.c.b16 %v2142, %v2140
          %v2227 = vpack.c.b16 %v2143, %v2141
          %v2228 = vpack.c.b16 %v2146, %v2144
          %v2229 = vpack.c.b16 %v2147, %v2145
          %v2230 = vpack.c.b16 %v2150, %v2148
          %v2231 = vpack.c.b16 %v2151, %v2149
          %v2232 = vpack.c.b16 %v2154, %v2152
          %v2233 = vpack.c.b16 %v2155, %v2153
          %v2234 = vpack.c.b16 %v2158, %v2156
          %v2235 = vpack.c.b16 %v2159, %v2157
          %v2236 = vpack.c.b16 %v2162, %v2160
          %v2237 = vpack.c.b16 %v2163, %v2161
          %v2238 = vpack.c.b16 %v2166, %v2164
          %v2239 = vpack.c.b16 %v2167, %v2165
          %v2240 = vpack.c.b16 %v2170, %v2168
          %v2241 = vpack.c.b16 %v2171, %v2169
          %v2242 = vpack.c.b16 %v2174, %v2172
          %v2243 = vpack.c.b16 %v2175, %v2173
          %v2244 = vpack.c.b16 %v2178, %v2176
          %v2245 = vpack.c.b16 %v2179, %v2177
          %v2246 = vpack.c.b16 %v2182, %v2180
          %v2247 = vpack.c.b16 %v2183, %v2181
          %2312 = vmatprep.subr.bf16.mxu0 %v2185
          %2313 = vmatpush1.bf16.msra.mxu0 %v2184
          %2314 = vmatprep.subr.bf16.mxu0 %v2187
          %2315 = vmatpush1.bf16.msra.mxu0 %v2186
          %2316 = vmatprep.subr.bf16.mxu0 %v2189
          %2317 = vmatpush1.bf16.msra.mxu0 %v2188
          %2318 = vmatprep.subr.bf16.mxu0 %v2191
          %2319 = vmatpush1.bf16.msra.mxu0 %v2190
          %2320 = vmatprep.subr.bf16.mxu0 %v2193
          %2321 = vmatpush1.bf16.msra.mxu0 %v2192
          %2322 = vmatprep.subr.bf16.mxu0 %v2195
          %2323 = vmatpush1.bf16.msra.mxu0 %v2194
          %2324 = vmatprep.subr.bf16.mxu0 %v2197
          %2325 = vmatpush1.bf16.msra.mxu0 %v2196
          %2326 = vmatprep.subr.bf16.mxu0 %v2199
          %2327 = vmatpush1.bf16.msra.mxu0 %v2198
          %2328 = vmatprep.subr.bf16.mxu0 %v2201
          %2329 = vmatpush1.bf16.msra.mxu0 %v2200
          %2330 = vmatprep.subr.bf16.mxu0 %v2203
          %2331 = vmatpush1.bf16.msra.mxu0 %v2202
          %2332 = vmatprep.subr.bf16.mxu0 %v2205
          %2333 = vmatpush1.bf16.msra.mxu0 %v2204
          %2334 = vmatprep.subr.bf16.mxu0 %v2207
          %2335 = vmatpush1.bf16.msra.mxu0 %v2206
          %2336 = vmatprep.subr.bf16.mxu0 %v2209
          %2337 = vmatpush1.bf16.msra.mxu0 %v2208
          %2338 = vmatprep.subr.bf16.mxu0 %v2211
          %2339 = vmatpush1.bf16.msra.mxu0 %v2210
          %2340 = vmatprep.subr.bf16.mxu0 %v2213
          %2341 = vmatpush1.bf16.msra.mxu0 %v2212
          %2342 = vmatprep.subr.bf16.mxu0 %v2215
          %2343 = vmatpush1.bf16.msra.mxu0 %v2214
          %2344 = vmatprep.mubr.bf16.mxu0 %v1913
          %2345 = vmatmul.mubr.bf16.gmra.mrb[0].mxu0 %v1912
          %v2346 = vpop.f32.mrb[0].mxu0
          %v2347 = vadd.f32 %v1985, %v2346
          %v2348 = vpop.f32.mrb[0].mxu0
          %v2349 = vadd.f32 %v1989, %v2348
          %v2350 = vpop.f32.mrb[0].mxu0
          %v2351 = vpop.f32.mrb[0].mxu0
          %2352 = vdwg.mxu0
          %2353 = vmatprep.subr.bf16.mxu0 %v2217
          %2354 = vmatpush1.bf16.msra.mxu0 %v2216
          %2355 = vmatprep.subr.bf16.mxu0 %v2219
          %2356 = vmatpush1.bf16.msra.mxu0 %v2218
          %2357 = vmatprep.subr.bf16.mxu0 %v2221
          %2358 = vmatpush1.bf16.msra.mxu0 %v2220
          %2359 = vmatprep.subr.bf16.mxu0 %v2223
          %2360 = vmatpush1.bf16.msra.mxu0 %v2222
          %2361 = vmatprep.subr.bf16.mxu0 %v2225
          %2362 = vmatpush1.bf16.msra.mxu0 %v2224
          %2363 = vmatprep.subr.bf16.mxu0 %v2227
          %2364 = vmatpush1.bf16.msra.mxu0 %v2226
          %2365 = vmatprep.subr.bf16.mxu0 %v2229
          %2366 = vmatpush1.bf16.msra.mxu0 %v2228
          %2367 = vmatprep.subr.bf16.mxu0 %v2231
          %2368 = vmatpush1.bf16.msra.mxu0 %v2230
          %2369 = vmatprep.subr.bf16.mxu0 %v2233
          %2370 = vmatpush1.bf16.msra.mxu0 %v2232
          %2371 = vmatprep.subr.bf16.mxu0 %v2235
          %2372 = vmatpush1.bf16.msra.mxu0 %v2234
          %2373 = vmatprep.subr.bf16.mxu0 %v2237
          %2374 = vmatpush1.bf16.msra.mxu0 %v2236
          %2375 = vmatprep.subr.bf16.mxu0 %v2239
          %2376 = vmatpush1.bf16.msra.mxu0 %v2238
          %2377 = vmatprep.subr.bf16.mxu0 %v2241
          %2378 = vmatpush1.bf16.msra.mxu0 %v2240
          %2379 = vmatprep.subr.bf16.mxu0 %v2243
          %2380 = vmatpush1.bf16.msra.mxu0 %v2242
          %2381 = vmatprep.subr.bf16.mxu0 %v2245
          %2382 = vmatpush1.bf16.msra.mxu0 %v2244
          %2383 = vmatprep.subr.bf16.mxu0 %v2247
          %2384 = vmatpush1.bf16.msra.mxu0 %v2246
          %2385 = vmatprep.mubr.bf16.mxu0 %v1915
          %2386 = vmatmul.mubr.bf16.gmra.mrb[0].mxu0 %v1914
          %v2387 = vpop.f32.mrb[0].mxu0
          %v2388 = vadd.f32 %v2347, %v2387
          %v2389 = vpop.f32.mrb[0].mxu0
          %v2390 = vadd.f32 %v2349, %v2389
          %v2391 = vpop.f32.mrb[0].mxu0
          %v2392 = vpop.f32.mrb[0].mxu0
          %2393 = vdwg.mxu0
          %v2394 = vmax.f32 %v2388, 0.0
          %v2395 = vmax.f32 %v2390, 0.0
          %v2396 = vld [vmem:[#allocation12] sm:$0x3]
          %v2397 = vunpack.c.l.bf16 %v2396
          %v2399 = vlaneseq
          %v2400 = vshrl.u32 %v2399, 7
          %v2401 = vsub.s32 0, %v2400
          %v2402 = vrot.slane %v2397, %v2401
          %v2403 = vlaneseq
          %v2404 = vshrl.u32 %v2403, 7
          %v2405 = vsub.s32 2, %v2404
          %v2406 = vrot.slane %v2397, %v2405
          %v2409 = vlaneseq
          %v2410 = vshrl.u32 %v2409, 7
          %v2411 = vsub.s32 0, %v2410
          %v2412 = vrot.slane %v2402, %v2411
          %v2413 = vlaneseq
          %v2414 = vshrl.u32 %v2413, 7
          %v2415 = vsub.s32 0, %v2414
          %v2416 = vrot.slane %v2406, %v2415
          %v2417 = vmul.f32 %v2394, %v2412
          %v2418 = vmul.f32 %v2395, %v2416
          %vm2419 = vcmask 1041408
          %v2420 = vsel %vm2419, %v2417, 0.0
          %v2421 = vsel %vm2419, %v2418, 0.0
          %v2422 = vadd.f32 %v2420, %v2421
          %2423 = vadd.xlane.f32.xlu0 %v2422
          %v2424 = vpop.xlane.xlu0 %2423
          %v2425 = vld [vmem:[#allocation3] sm:$0x1]
          %v2427 = vlaneseq
          %v2428 = vshrl.u32 %v2427, 7
          %v2429 = vsub.s32 0, %v2428
          %v2430 = vrot.slane %v2425, %v2429
          %v2432 = vadd.f32 %v2424, %v2430
          %vm2433 = vcmask 1024
          %2434 = vst.msk [vmem:[%s7] sm:$0x3] %vm2433, %v2432
        $region80: #{tpu_custom_call.1} parent=47 // pred_fallthru
          _
        // Predicated region
        $region81: #{tpu_custom_call.1} parent=47 // pred_check
          %p2435 = pneg %p198
        $region82: #{tpu_custom_call.1} parent=47 // pred_check_branch
          %2437 = sbr.rel (%p2435) target = $region84
        $region83: #{tpu_custom_call.1} parent=47 // pred_region
          _
        $region84: #{tpu_custom_call.1} parent=47 // pred_fallthru
          _
        // Predicated region
        $region85: #{tpu_custom_call.1} parent=47 // pred_check
          %p2438 = pneg %p198
        $region86: #{tpu_custom_call.1} parent=47 // pred_check_branch
          %2440 = sbr.rel (%p2438) target = $region88
        $region87: #{tpu_custom_call.1} parent=47 // pred_region
          _
        $region88: #{tpu_custom_call.1} parent=47 // pred_fallthru
          _
      $region48: #{tpu_custom_call.1} parent=5 // pred_fallthru
        _
      %p2441 = scmp.le.s32.totalorder 2, %s23
      // Predicated region
      $region89: #{tpu_custom_call.1} parent=5 // pred_check
        %p2442 = pneg %p2441
      $region90: #{tpu_custom_call.1} parent=5 // pred_check_branch
        %2444 = sbr.rel (%p2442) target = $region92
      $region91: #{tpu_custom_call.1} parent=5 // pred_region
        %s2445 = ssub.s32 %s23, 2
      $region92: #{tpu_custom_call.1} parent=5 // pred_fallthru
        _
    $region6: #{tpu_custom_call.1} parent=1 // loop_footer
      %s27 = sadd.s32 1, %s23
    $region7: #{tpu_custom_call.1} parent=1 // loop_footer_branch
      %22 = sbr.rel target = $region3
    $region8: #{tpu_custom_call.1} parent=1 // loop_exit
      _
    %2446 = vsyncpa [#allocation5], 1
    %s2447 = scalar_lea.sflag [#allocation5], 1
    %2448 = vsyncpa %s2447, 1
    %2449 = vsyncpa [#allocation7], 1
    %s2450 = scalar_lea.sflag [#allocation7], 1
    %2451 = vsyncpa %s2450, 1
    %2452 = vsyncpa [#allocation10], 1
    %2453 = vsyncpa [#allocation13], 1

</llo_original>
